<compile_context>
chip_gen: v7x
topology: tpu7x:2x2x1
jax: 0.10.0
libtpu: 0.0.40
codegen_flags: <defaults>
</compile_context>

<pallas_src>
import math
import jax
import jax.numpy as jnp
from jax import lax
from jax.experimental import pallas as pl
from jax.experimental.pallas import tpu as pltpu

D_MODEL = 32
N_HEADS = 4
D_HEAD = D_MODEL // N_HEADS
D_FF = 64
EPS = 1e-5  # torch.nn.LayerNorm default eps


def _layer_norm(x, g, b):
    mu = jnp.mean(x, axis=-1, keepdims=True)
    var = jnp.mean((x - mu) ** 2, axis=-1, keepdims=True)  # biased, like PyTorch
    return (x - mu) * lax.rsqrt(var + EPS) * g + b


def _make_kernel(b_tile: int, t: int):
    bt = b_tile * t          # rows per grid step
    ht = N_HEADS * t         # heads folded into the key/lane axis
    H = N_HEADS
    D = D_MODEL

    def kernel(
        x_ref, maskrep_ref, bmask_ref, gsum_ref,
        ln1_g_ref, ln1_b_ref,
        wqkv_ref, bqkv_ref, wo_ref, bo_ref,
        ln2_g_ref, ln2_b_ref,
        w1_ref, b1_ref, w2_ref, b2_ref,
        out_ref,
    ):
        x = x_ref[...]                        # (bt, D)
        mask_rep = maskrep_ref[...]           # (b_tile, 1, ht): 1.0 valid / 0.0 masked, tiled per head
        bmask = bmask_ref[...]                # (ht, D)  block-diag head mask
        gsum = gsum_ref[...]                  # (ht, ht) per-head group-sum matrix

        # Additive mask bias (0 valid / -1e9 masked).  Only equivalent to a
        # jnp.where replacement while |raw scores| << 1e9 (true at these scales).
        bias = (mask_rep - 1.0) * 1e9

        # ---- block 1: pre-norm + fused QKV + block-diagonal self-attention ----
        xn = _layer_norm(x, ln1_g_ref[...], ln1_b_ref[...])
        qkv = jnp.dot(xn, wqkv_ref[...],
                      preferred_element_type=jnp.float32) + bqkv_ref[...]   # (bt, 3D)

        q3 = qkv[:, 0 * D:1 * D].reshape(b_tile, t, D)   # Q columns pre-scaled by 1/sqrt(d_head)
        k3 = qkv[:, 1 * D:2 * D].reshape(b_tile, t, D)
        v3 = qkv[:, 2 * D:3 * D].reshape(b_tile, t, D)

        # Block-diagonal K'/V' (b_tile, ht, D): heads live in the ht axis, so the
        # attention matmuls need no head split and produce the concat-of-heads
        # layout directly.
        kbd = jnp.concatenate([k3] * H, axis=1) * bmask
        vbd = jnp.concatenate([v3] * H, axis=1) * bmask

        sc = jnp.einsum('btd,bjd->btj', q3, kbd,
                        preferred_element_type=jnp.float32) + bias          # (b_tile, t, ht)
        # Row-global max: softmax is invariant to any per-row constant shared
        # within each head group, so this matches the per-head reference exactly.
        m = jnp.max(sc, axis=-1, keepdims=True)
        e = jnp.exp(sc - m)
        # Per-head denominators, broadcast back to every lane of the group by a
        # single (bt, ht) @ (ht, ht) matmul.
        srep = jnp.dot(e.reshape(bt, ht), gsum,
                       preferred_element_type=jnp.float32).reshape(b_tile, t, ht)
        attn = e * pl.reciprocal(srep, approx=False) * mask_rep   # softmax + espnet re-mask

        ctx = jnp.einsum('btj,bjd->btd', attn, vbd,
                         preferred_element_type=jnp.float32)                # (b_tile, t, D)
        ctx2 = ctx.reshape(bt, D)                                           # leading merge, free

        att = jnp.dot(ctx2, wo_ref[...],
                      preferred_element_type=jnp.float32) + bo_ref[...]
        x1 = x + att                   # dropout is identity at inference

        # ---- block 2: pre-norm + positionwise feed-forward + residual ----
        xn2 = _layer_norm(x1, ln2_g_ref[...], ln2_b_ref[...])
        hdn = jnp.maximum(
            jnp.dot(xn2, w1_ref[...], preferred_element_type=jnp.float32) + b1_ref[...],
            0.0)
        y = x1 + jnp.dot(hdn, w2_ref[...],
                         preferred_element_type=jnp.float32) + b2_ref[...]  # (bt, D)

        # ---- lane-dense store: (bt, D) -> (b_tile, t*D) ----
        y3 = y.reshape(b_tile, t, D)
        out_ref[...] = jnp.concatenate([y3[:, s, :] for s in range(t)], axis=-1)

    return kernel


def transformer_layer(x, mask, pos_emb, params, b_tile=None):
    B, T, D = x.shape
    assert D == D_MODEL and D_MODEL % N_HEADS == 0
    assert T % 8 == 0, "sublane-aligned sequence length expected for this demo"
    if b_tile is None:
        # Single grid step: v5e/v6e have one TensorCore and per-step overhead
        # dominates at these shapes.
        # TODO(synk): on v7x with realistic batches use b_tile = B // 2 (grid 2,
        #             "parallel") once per-step work exceeds the ~600-cycle overhead.
        b_tile = B
    assert B % b_tile == 0
    # The out block's second-minor dim is b_tile -> must be the full B or 8-aligned.
    assert b_tile == B or b_tile % 8 == 0
    grid_b = B // b_tile
    bt = b_tile * T
    ht = N_HEADS * T

    # Fused QKV weight/bias; fold 1/sqrt(d_head) into the Q projection columns
    # (rounding order differs slightly from scaling after the matmul; within 1e-4 here).
    scale = 1.0 / math.sqrt(D_HEAD)
    wqkv = jnp.concatenate(
        [params["wq"] * scale, params["wk"], params["wv"]], axis=1)   # (D, 3D)
    bqkv = jnp.concatenate(
        [params["bq"] * scale, params["bk"], params["bv"]], axis=1)   # (1, 3D)

    x2 = x.reshape(B * T, D)
    # Key mask pre-tiled per head: (B, 1, H*T); no per-step mask materialization in-kernel.
    mask_rep = jnp.tile(mask.astype(jnp.float32).reshape(B, 1, T), (1, 1, N_HEADS))

    # Constant block-diagonal head mask and per-head group-sum matrix.
    j = jnp.arange(ht)[:, None]
    bmask = (j // T == jnp.arange(D_MODEL)[None, :] // D_HEAD).astype(jnp.float32)  # (ht, D)
    gsum = (j // T == jnp.arange(ht)[None, :] // T).astype(jnp.float32)             # (ht, ht)

    flat = [
        bmask, gsum,
        params["ln1_g"], params["ln1_b"],
        wqkv, bqkv, params["wo"], params["bo"],
        params["ln2_g"], params["ln2_b"],
        params["w1"], params["b1"], params["w2"], params["b2"],
    ]

    def full_spec(a):
        # Constant index_map: weights/constants are not re-DMA'd per grid step.
        nd = a.ndim
        return pl.BlockSpec(a.shape, lambda i, _nd=nd: (0,) * _nd)

    in_specs = [
        pl.BlockSpec((bt, D), lambda i: (i, 0)),
        pl.BlockSpec((b_tile, 1, ht), lambda i: (i, 0, 0)),
    ] + [full_spec(a) for a in flat]

    out_dense = pl.pallas_call(
        _make_kernel(b_tile, T),
        out_shape=jax.ShapeDtypeStruct((B, T * D), jnp.float32),   # lane-dense (T*D = 256)
        grid_spec=pltpu.PrefetchScalarGridSpec(
            num_scalar_prefetch=0,
            grid=(grid_b,),
            in_specs=in_specs,
            out_specs=pl.BlockSpec((b_tile, T * D), lambda i: (i, 0)),
        ),
        compiler_params=pltpu.CompilerParams(
            dimension_semantics=("arbitrary",) if grid_b == 1 else ("parallel",)),
    )(x2, mask_rep, *flat)
    return out_dense.reshape(B, T, D), mask, pos_emb


def init_params(key):
    ks = jax.random.split(key, 12)

    def lin_w(k, din, dout):
        return jax.random.normal(k, (din, dout), jnp.float32) / math.sqrt(din)

    def lin_b(k, dout):
        return jax.random.normal(k, (1, dout), jnp.float32) * 0.01

    p = {}
    p["ln1_g"] = jnp.ones((1, D_MODEL), jnp.float32)
    p["ln1_b"] = jnp.zeros((1, D_MODEL), jnp.float32)
    p["ln2_g"] = jnp.ones((1, D_MODEL), jnp.float32)
    p["ln2_b"] = jnp.zeros((1, D_MODEL), jnp.float32)
    p["wq"], p["bq"] = lin_w(ks[0], D_MODEL, D_MODEL), lin_b(ks[1], D_MODEL)
    p["wk"], p["bk"] = lin_w(ks[2], D_MODEL, D_MODEL), lin_b(ks[3], D_MODEL)
    p["wv"], p["bv"] = lin_w(ks[4], D_MODEL, D_MODEL), lin_b(ks[5], D_MODEL)
    p["wo"], p["bo"] = lin_w(ks[6], D_MODEL, D_MODEL), lin_b(ks[7], D_MODEL)
    p["w1"], p["b1"] = lin_w(ks[8], D_MODEL, D_FF), lin_b(ks[9], D_FF)
    p["w2"], p["b2"] = lin_w(ks[10], D_FF, D_MODEL), lin_b(ks[11], D_MODEL)
    return p


def reference(x, mask, params):
    """Pure-JAX mirror of the PyTorch forward (eval mode) for verification."""
    B, T, D = x.shape

    def ln(y, g, b):
        mu = jnp.mean(y, axis=-1, keepdims=True)
        var = jnp.mean((y - mu) ** 2, axis=-1, keepdims=True)
        return (y - mu) * lax.rsqrt(var + EPS) * g + b

    xn = ln(x, params["ln1_g"], params["ln1_b"])
    q = jnp.einsum("btd,de->bte", xn, params["wq"]) + params["bq"]
    k = jnp.einsum("btd,de->bte", xn, params["wk"]) + params["bk"]
    v = jnp.einsum("btd,de->bte", xn, params["wv"]) + params["bv"]
    q = q.reshape(B, T, N_HEADS, D_HEAD)
    k = k.reshape(B, T, N_HEADS, D_HEAD)
    v = v.reshape(B, T, N_HEADS, D_HEAD)
    sc = jnp.einsum("bthd,bshd->bhts", q, k) / math.sqrt(D_HEAD)
    m3 = mask[:, None, None, :]
    sc = jnp.where(m3 == 0.0, -1e9, sc)
    attn = jax.nn.softmax(sc, axis=-1)
    attn = jnp.where(m3 == 0.0, 0.0, attn)
    ctx = jnp.einsum("bhts,bshd->bthd", attn, v).reshape(B, T, D)
    att_out = jnp.einsum("btd,de->bte", ctx, params["wo"]) + params["bo"]
    x1 = x + att_out
    xn2 = ln(x1, params["ln2_g"], params["ln2_b"])
    hdn = jnp.maximum(jnp.einsum("btd,df->btf", xn2, params["w1"]) + params["b1"], 0.0)
    ffn = jnp.einsum("btf,fd->btd", hdn, params["w2"]) + params["b2"]
    return x1 + ffn


if __name__ == "__main__":
    key = jax.random.PRNGKey(0)
    kx, kp = jax.random.split(key)
    B, T = 4, 8
    x = jax.random.normal(kx, (B, T, D_MODEL), jnp.float32)
    mask = jnp.ones((B, T), jnp.float32)
    mask = mask.at[1, -2:].set(0.0).at[3, -3:].set(0.0)   # mask trailing keys
    # pos_emb is passed through untouched (vanilla MultiHeadedAttention ignores it).
    pos_emb = jnp.zeros((1, T, D_MODEL), jnp.float32)

    params = init_params(kp)
    out, mask_out, pos_out = transformer_layer(x, mask, pos_emb, params)
    out = jax.block_until_ready(out)

    ref = reference(x, mask, params)
    err = float(jnp.max(jnp.abs(out - ref)))
    assert jnp.allclose(out, ref, atol=1e-4, rtol=1e-4), f"max abs err {err}"
    print("KERNEL_OK")
</pallas_src>

<mosaic_0001>
module attributes {stable_mosaic.version = 11 : i64} {
  func.func @kernel(%arg0: i32, %arg1: memref<32x32xf32, #tpu.memory_space<vmem>>, %arg2: memref<4x1x32xf32, #tpu.memory_space<vmem>>, %arg3: memref<32x32xf32, #tpu.memory_space<vmem>>, %arg4: memref<32x32xf32, #tpu.memory_space<vmem>>, %arg5: memref<1x32xf32, #tpu.memory_space<vmem>>, %arg6: memref<1x32xf32, #tpu.memory_space<vmem>>, %arg7: memref<32x96xf32, #tpu.memory_space<vmem>>, %arg8: memref<1x96xf32, #tpu.memory_space<vmem>>, %arg9: memref<32x32xf32, #tpu.memory_space<vmem>>, %arg10: memref<1x32xf32, #tpu.memory_space<vmem>>, %arg11: memref<1x32xf32, #tpu.memory_space<vmem>>, %arg12: memref<1x32xf32, #tpu.memory_space<vmem>>, %arg13: memref<32x64xf32, #tpu.memory_space<vmem>>, %arg14: memref<1x64xf32, #tpu.memory_space<vmem>>, %arg15: memref<64x32xf32, #tpu.memory_space<vmem>>, %arg16: memref<1x32xf32, #tpu.memory_space<vmem>>, %arg17: memref<4x256xf32, #tpu.memory_space<vmem>>) attributes {dimension_semantics = [#tpu.dimension_semantics<arbitrary>], iteration_bounds = array<i64: 1>, scalar_prefetch = 0 : i64, scratch_operands = 0 : i64, tpu.core_type = #tpu.core_type<tc>, window_params = [{transform_indices = @transform_0, window_bounds = array<i64: 32, 32>}, {transform_indices = @transform_1, window_bounds = array<i64: 4, 1, 32>}, {pipeline_mode = #tpu.pipeline_mode<synchronous>, transform_indices = @transform_2, window_bounds = array<i64: 32, 32>}, {pipeline_mode = #tpu.pipeline_mode<synchronous>, transform_indices = @transform_3, window_bounds = array<i64: 32, 32>}, {pipeline_mode = #tpu.pipeline_mode<synchronous>, transform_indices = @transform_4, window_bounds = array<i64: 1, 32>}, {pipeline_mode = #tpu.pipeline_mode<synchronous>, transform_indices = @transform_5, window_bounds = array<i64: 1, 32>}, {pipeline_mode = #tpu.pipeline_mode<synchronous>, transform_indices = @transform_6, window_bounds = array<i64: 32, 96>}, {pipeline_mode = #tpu.pipeline_mode<synchronous>, transform_indices = @transform_7, window_bounds = array<i64: 1, 96>}, {pipeline_mode = #tpu.pipeline_mode<synchronous>, transform_indices = @transform_8, window_bounds = array<i64: 32, 32>}, {pipeline_mode = #tpu.pipeline_mode<synchronous>, transform_indices = @transform_9, window_bounds = array<i64: 1, 32>}, {pipeline_mode = #tpu.pipeline_mode<synchronous>, transform_indices = @transform_10, window_bounds = array<i64: 1, 32>}, {pipeline_mode = #tpu.pipeline_mode<synchronous>, transform_indices = @transform_11, window_bounds = array<i64: 1, 32>}, {pipeline_mode = #tpu.pipeline_mode<synchronous>, transform_indices = @transform_12, window_bounds = array<i64: 32, 64>}, {pipeline_mode = #tpu.pipeline_mode<synchronous>, transform_indices = @transform_13, window_bounds = array<i64: 1, 64>}, {pipeline_mode = #tpu.pipeline_mode<synchronous>, transform_indices = @transform_14, window_bounds = array<i64: 64, 32>}, {pipeline_mode = #tpu.pipeline_mode<synchronous>, transform_indices = @transform_15, window_bounds = array<i64: 1, 32>}, {transform_indices = @transform_16, window_bounds = array<i64: 4, 256>}]} {
    %c0 = arith.constant 0 : index
    %c0_0 = arith.constant 0 : index
    %0 = vector.load %arg1[%c0, %c0_0] : memref<32x32xf32, #tpu.memory_space<vmem>>, vector<32x32xf32>
    %c0_1 = arith.constant 0 : index
    %c0_2 = arith.constant 0 : index
    %c0_3 = arith.constant 0 : index
    %1 = vector.load %arg2[%c0_1, %c0_2, %c0_3] : memref<4x1x32xf32, #tpu.memory_space<vmem>>, vector<4x1x32xf32>
    %c0_4 = arith.constant 0 : index
    %c0_5 = arith.constant 0 : index
    %2 = vector.load %arg3[%c0_4, %c0_5] : memref<32x32xf32, #tpu.memory_space<vmem>>, vector<32x32xf32>
    %c0_6 = arith.constant 0 : index
    %c0_7 = arith.constant 0 : index
    %3 = vector.load %arg4[%c0_6, %c0_7] : memref<32x32xf32, #tpu.memory_space<vmem>>, vector<32x32xf32>
    %cst = arith.constant 1.000000e+00 : f32
    %4 = vector.broadcast %cst : f32 to vector<4x1x32xf32>
    %5 = arith.subf %1, %4 : vector<4x1x32xf32>
    %cst_8 = arith.constant 1.000000e+09 : f32
    %6 = vector.broadcast %cst_8 : f32 to vector<4x1x32xf32>
    %7 = arith.mulf %5, %6 : vector<4x1x32xf32>
    %c0_9 = arith.constant 0 : index
    %c0_10 = arith.constant 0 : index
    %8 = vector.load %arg5[%c0_9, %c0_10] : memref<1x32xf32, #tpu.memory_space<vmem>>, vector<1x32xf32>
    %c0_11 = arith.constant 0 : index
    %c0_12 = arith.constant 0 : index
    %9 = vector.load %arg6[%c0_11, %c0_12] : memref<1x32xf32, #tpu.memory_space<vmem>>, vector<1x32xf32>
    %cst_13 = arith.constant dense<0.000000e+00> : vector<32xf32>
    %10 = vector.multi_reduction <add>, %0, %cst_13 [1] : vector<32x32xf32> to vector<32xf32>
    %11 = vector.shape_cast %10 : vector<32xf32> to vector<32x1xf32>
    %cst_14 = arith.constant 3.200000e+01 : f32
    %12 = vector.broadcast %cst_14 : f32 to vector<32x1xf32>
    %13 = arith.divf %11, %12 : vector<32x1xf32>
    %14 = vector.broadcast %13 : vector<32x1xf32> to vector<32x32xf32>
    %15 = arith.subf %0, %14 : vector<32x32xf32>
    %16 = arith.mulf %15, %15 : vector<32x32xf32>
    %cst_15 = arith.constant dense<0.000000e+00> : vector<32xf32>
    %17 = vector.multi_reduction <add>, %16, %cst_15 [1] : vector<32x32xf32> to vector<32xf32>
    %18 = vector.shape_cast %17 : vector<32xf32> to vector<32x1xf32>
    %cst_16 = arith.constant 3.200000e+01 : f32
    %19 = vector.broadcast %cst_16 : f32 to vector<32x1xf32>
    %20 = arith.divf %18, %19 : vector<32x1xf32>
    %21 = vector.broadcast %13 : vector<32x1xf32> to vector<32x32xf32>
    %22 = arith.subf %0, %21 : vector<32x32xf32>
    %cst_17 = arith.constant 9.99999974E-6 : f32
    %23 = vector.broadcast %cst_17 : f32 to vector<32x1xf32>
    %24 = arith.addf %20, %23 : vector<32x1xf32>
    %25 = math.rsqrt %24 : vector<32x1xf32>
    %26 = vector.broadcast %25 : vector<32x1xf32> to vector<32x32xf32>
    %27 = arith.mulf %22, %26 : vector<32x32xf32>
    %28 = vector.broadcast %8 : vector<1x32xf32> to vector<32x32xf32>
    %29 = arith.mulf %27, %28 : vector<32x32xf32>
    %30 = vector.broadcast %9 : vector<1x32xf32> to vector<32x32xf32>
    %31 = arith.addf %29, %30 : vector<32x32xf32>
    %c0_18 = arith.constant 0 : index
    %c0_19 = arith.constant 0 : index
    %32 = vector.load %arg7[%c0_18, %c0_19] : memref<32x96xf32, #tpu.memory_space<vmem>>, vector<32x96xf32>
    %cst_20 = arith.constant dense<0.000000e+00> : vector<32x96xf32>
    %33 = tpu.matmul %31, %32, %cst_20 {dimension_numbers = #tpu.dot_dimension_numbers<[1], [0], [0], [1], [0, 0, 1, 1], [], []>} : vector<32x32xf32>, vector<32x96xf32>, vector<32x96xf32> -> vector<32x96xf32>
    %c0_21 = arith.constant 0 : index
    %c0_22 = arith.constant 0 : index
    %34 = vector.load %arg8[%c0_21, %c0_22] : memref<1x96xf32, #tpu.memory_space<vmem>>, vector<1x96xf32>
    %35 = vector.broadcast %34 : vector<1x96xf32> to vector<32x96xf32>
    %36 = arith.addf %33, %35 : vector<32x96xf32>
    %37 = vector.extract_strided_slice %36 {offsets = [0, 0], sizes = [32, 32], strides = [1, 1]} : vector<32x96xf32> to vector<32x32xf32>
    %38 = vector.shape_cast %37 : vector<32x32xf32> to vector<4x8x32xf32>
    %39 = vector.extract_strided_slice %36 {offsets = [0, 32], sizes = [32, 32], strides = [1, 1]} : vector<32x96xf32> to vector<32x32xf32>
    %40 = vector.shape_cast %39 : vector<32x32xf32> to vector<4x8x32xf32>
    %41 = vector.extract_strided_slice %36 {offsets = [0, 64], sizes = [32, 32], strides = [1, 1]} : vector<32x96xf32> to vector<32x32xf32>
    %42 = vector.shape_cast %41 : vector<32x32xf32> to vector<4x8x32xf32>
    %43 = tpu.concatenate %40, %40, %40, %40 in 1 : vector<4x8x32xf32>, vector<4x8x32xf32>, vector<4x8x32xf32>, vector<4x8x32xf32> -> vector<4x32x32xf32>
    %44 = vector.shape_cast %2 : vector<32x32xf32> to vector<1x32x32xf32>
    %45 = vector.broadcast %44 : vector<1x32x32xf32> to vector<4x32x32xf32>
    %46 = arith.mulf %43, %45 : vector<4x32x32xf32>
    %47 = tpu.concatenate %42, %42, %42, %42 in 1 : vector<4x8x32xf32>, vector<4x8x32xf32>, vector<4x8x32xf32>, vector<4x8x32xf32> -> vector<4x32x32xf32>
    %48 = vector.shape_cast %2 : vector<32x32xf32> to vector<1x32x32xf32>
    %49 = vector.broadcast %48 : vector<1x32x32xf32> to vector<4x32x32xf32>
    %50 = arith.mulf %47, %49 : vector<4x32x32xf32>
    "tpu.trace_start"() <{level = 10 : i32, message = "btd,bjd->btj"}> : () -> ()
    %cst_23 = arith.constant dense<0.000000e+00> : vector<4x8x32xf32>
    %51 = tpu.matmul %38, %46, %cst_23 {dimension_numbers = #tpu.dot_dimension_numbers<[2], [2], [1], [1], [0, 0, 0, 1, 1, 1], [0], [0]>} : vector<4x8x32xf32>, vector<4x32x32xf32>, vector<4x8x32xf32> -> vector<4x8x32xf32>
    "tpu.trace_stop"() : () -> ()
    %52 = vector.broadcast %7 : vector<4x1x32xf32> to vector<4x8x32xf32>
    %53 = arith.addf %51, %52 : vector<4x8x32xf32>
    %cst_24 = arith.constant dense<0xFF800000> : vector<4x8xf32>
    %54 = vector.multi_reduction <maximumf>, %53, %cst_24 [2] : vector<4x8x32xf32> to vector<4x8xf32>
    %55 = vector.shape_cast %54 : vector<4x8xf32> to vector<4x8x1xf32>
    %56 = vector.broadcast %55 : vector<4x8x1xf32> to vector<4x8x32xf32>
    %57 = arith.subf %53, %56 : vector<4x8x32xf32>
    %58 = math.exp %57 : vector<4x8x32xf32>
    %59 = vector.shape_cast %58 : vector<4x8x32xf32> to vector<32x32xf32>
    %cst_25 = arith.constant dense<0.000000e+00> : vector<32x32xf32>
    %60 = tpu.matmul %59, %3, %cst_25 {dimension_numbers = #tpu.dot_dimension_numbers<[1], [0], [0], [1], [0, 0, 1, 1], [], []>} : vector<32x32xf32>, vector<32x32xf32>, vector<32x32xf32> -> vector<32x32xf32>
    %61 = vector.shape_cast %60 : vector<32x32xf32> to vector<4x8x32xf32>
    %62 = tpu.reciprocal %61 : vector<4x8x32xf32> -> vector<4x8x32xf32>
    %63 = arith.mulf %58, %62 : vector<4x8x32xf32>
    %64 = vector.broadcast %1 : vector<4x1x32xf32> to vector<4x8x32xf32>
    %65 = arith.mulf %63, %64 : vector<4x8x32xf32>
    "tpu.trace_start"() <{level = 10 : i32, message = "btj,bjd->btd"}> : () -> ()
    %cst_26 = arith.constant dense<0.000000e+00> : vector<4x8x32xf32>
    %66 = tpu.matmul %65, %50, %cst_26 {dimension_numbers = #tpu.dot_dimension_numbers<[2], [1], [1], [2], [0, 0, 0, 1, 1, 2], [0], [0]>} : vector<4x8x32xf32>, vector<4x32x32xf32>, vector<4x8x32xf32> -> vector<4x8x32xf32>
    "tpu.trace_stop"() : () -> ()
    %67 = vector.shape_cast %66 : vector<4x8x32xf32> to vector<32x32xf32>
    %c0_27 = arith.constant 0 : index
    %c0_28 = arith.constant 0 : index
    %68 = vector.load %arg9[%c0_27, %c0_28] : memref<32x32xf32, #tpu.memory_space<vmem>>, vector<32x32xf32>
    %cst_29 = arith.constant dense<0.000000e+00> : vector<32x32xf32>
    %69 = tpu.matmul %67, %68, %cst_29 {dimension_numbers = #tpu.dot_dimension_numbers<[1], [0], [0], [1], [0, 0, 1, 1], [], []>} : vector<32x32xf32>, vector<32x32xf32>, vector<32x32xf32> -> vector<32x32xf32>
    %c0_30 = arith.constant 0 : index
    %c0_31 = arith.constant 0 : index
    %70 = vector.load %arg10[%c0_30, %c0_31] : memref<1x32xf32, #tpu.memory_space<vmem>>, vector<1x32xf32>
    %71 = vector.broadcast %70 : vector<1x32xf32> to vector<32x32xf32>
    %72 = arith.addf %69, %71 : vector<32x32xf32>
    %73 = arith.addf %0, %72 : vector<32x32xf32>
    %c0_32 = arith.constant 0 : index
    %c0_33 = arith.constant 0 : index
    %74 = vector.load %arg11[%c0_32, %c0_33] : memref<1x32xf32, #tpu.memory_space<vmem>>, vector<1x32xf32>
    %c0_34 = arith.constant 0 : index
    %c0_35 = arith.constant 0 : index
    %75 = vector.load %arg12[%c0_34, %c0_35] : memref<1x32xf32, #tpu.memory_space<vmem>>, vector<1x32xf32>
    %cst_36 = arith.constant dense<0.000000e+00> : vector<32xf32>
    %76 = vector.multi_reduction <add>, %73, %cst_36 [1] : vector<32x32xf32> to vector<32xf32>
    %77 = vector.shape_cast %76 : vector<32xf32> to vector<32x1xf32>
    %cst_37 = arith.constant 3.200000e+01 : f32
    %78 = vector.broadcast %cst_37 : f32 to vector<32x1xf32>
    %79 = arith.divf %77, %78 : vector<32x1xf32>
    %80 = vector.broadcast %79 : vector<32x1xf32> to vector<32x32xf32>
    %81 = arith.subf %73, %80 : vector<32x32xf32>
    %82 = arith.mulf %81, %81 : vector<32x32xf32>
    %cst_38 = arith.constant dense<0.000000e+00> : vector<32xf32>
    %83 = vector.multi_reduction <add>, %82, %cst_38 [1] : vector<32x32xf32> to vector<32xf32>
    %84 = vector.shape_cast %83 : vector<32xf32> to vector<32x1xf32>
    %cst_39 = arith.constant 3.200000e+01 : f32
    %85 = vector.broadcast %cst_39 : f32 to vector<32x1xf32>
    %86 = arith.divf %84, %85 : vector<32x1xf32>
    %87 = vector.broadcast %79 : vector<32x1xf32> to vector<32x32xf32>
    %88 = arith.subf %73, %87 : vector<32x32xf32>
    %cst_40 = arith.constant 9.99999974E-6 : f32
    %89 = vector.broadcast %cst_40 : f32 to vector<32x1xf32>
    %90 = arith.addf %86, %89 : vector<32x1xf32>
    %91 = math.rsqrt %90 : vector<32x1xf32>
    %92 = vector.broadcast %91 : vector<32x1xf32> to vector<32x32xf32>
    %93 = arith.mulf %88, %92 : vector<32x32xf32>
    %94 = vector.broadcast %74 : vector<1x32xf32> to vector<32x32xf32>
    %95 = arith.mulf %93, %94 : vector<32x32xf32>
    %96 = vector.broadcast %75 : vector<1x32xf32> to vector<32x32xf32>
    %97 = arith.addf %95, %96 : vector<32x32xf32>
    %c0_41 = arith.constant 0 : index
    %c0_42 = arith.constant 0 : index
    %98 = vector.load %arg13[%c0_41, %c0_42] : memref<32x64xf32, #tpu.memory_space<vmem>>, vector<32x64xf32>
    %cst_43 = arith.constant dense<0.000000e+00> : vector<32x64xf32>
    %99 = tpu.matmul %97, %98, %cst_43 {dimension_numbers = #tpu.dot_dimension_numbers<[1], [0], [0], [1], [0, 0, 1, 1], [], []>} : vector<32x32xf32>, vector<32x64xf32>, vector<32x64xf32> -> vector<32x64xf32>
    %c0_44 = arith.constant 0 : index
    %c0_45 = arith.constant 0 : index
    %100 = vector.load %arg14[%c0_44, %c0_45] : memref<1x64xf32, #tpu.memory_space<vmem>>, vector<1x64xf32>
    %101 = vector.broadcast %100 : vector<1x64xf32> to vector<32x64xf32>
    %102 = arith.addf %99, %101 : vector<32x64xf32>
    %cst_46 = arith.constant 0.000000e+00 : f32
    %103 = vector.broadcast %cst_46 : f32 to vector<32x64xf32>
    %104 = arith.maximumf %102, %103 : vector<32x64xf32>
    %c0_47 = arith.constant 0 : index
    %c0_48 = arith.constant 0 : index
    %105 = vector.load %arg15[%c0_47, %c0_48] : memref<64x32xf32, #tpu.memory_space<vmem>>, vector<64x32xf32>
    %cst_49 = arith.constant dense<0.000000e+00> : vector<32x32xf32>
    %106 = tpu.matmul %104, %105, %cst_49 {dimension_numbers = #tpu.dot_dimension_numbers<[1], [0], [0], [1], [0, 0, 1, 1], [], []>} : vector<32x64xf32>, vector<64x32xf32>, vector<32x32xf32> -> vector<32x32xf32>
    %107 = arith.addf %73, %106 : vector<32x32xf32>
    %c0_50 = arith.constant 0 : index
    %c0_51 = arith.constant 0 : index
    %108 = vector.load %arg16[%c0_50, %c0_51] : memref<1x32xf32, #tpu.memory_space<vmem>>, vector<1x32xf32>
    %109 = vector.broadcast %108 : vector<1x32xf32> to vector<32x32xf32>
    %110 = arith.addf %107, %109 : vector<32x32xf32>
    %111 = vector.shape_cast %110 : vector<32x32xf32> to vector<4x8x32xf32>
    %112 = vector.extract_strided_slice %111 {offsets = [0, 0, 0], sizes = [4, 1, 32], strides = [1, 1, 1]} : vector<4x8x32xf32> to vector<4x1x32xf32>
    %113 = vector.shape_cast %112 : vector<4x1x32xf32> to vector<4x32xf32>
    %114 = vector.extract_strided_slice %111 {offsets = [0, 1, 0], sizes = [4, 1, 32], strides = [1, 1, 1]} : vector<4x8x32xf32> to vector<4x1x32xf32>
    %115 = vector.shape_cast %114 : vector<4x1x32xf32> to vector<4x32xf32>
    %116 = vector.extract_strided_slice %111 {offsets = [0, 2, 0], sizes = [4, 1, 32], strides = [1, 1, 1]} : vector<4x8x32xf32> to vector<4x1x32xf32>
    %117 = vector.shape_cast %116 : vector<4x1x32xf32> to vector<4x32xf32>
    %118 = vector.extract_strided_slice %111 {offsets = [0, 3, 0], sizes = [4, 1, 32], strides = [1, 1, 1]} : vector<4x8x32xf32> to vector<4x1x32xf32>
    %119 = vector.shape_cast %118 : vector<4x1x32xf32> to vector<4x32xf32>
    %120 = vector.extract_strided_slice %111 {offsets = [0, 4, 0], sizes = [4, 1, 32], strides = [1, 1, 1]} : vector<4x8x32xf32> to vector<4x1x32xf32>
    %121 = vector.shape_cast %120 : vector<4x1x32xf32> to vector<4x32xf32>
    %122 = vector.extract_strided_slice %111 {offsets = [0, 5, 0], sizes = [4, 1, 32], strides = [1, 1, 1]} : vector<4x8x32xf32> to vector<4x1x32xf32>
    %123 = vector.shape_cast %122 : vector<4x1x32xf32> to vector<4x32xf32>
    %124 = vector.extract_strided_slice %111 {offsets = [0, 6, 0], sizes = [4, 1, 32], strides = [1, 1, 1]} : vector<4x8x32xf32> to vector<4x1x32xf32>
    %125 = vector.shape_cast %124 : vector<4x1x32xf32> to vector<4x32xf32>
    %126 = vector.extract_strided_slice %111 {offsets = [0, 7, 0], sizes = [4, 1, 32], strides = [1, 1, 1]} : vector<4x8x32xf32> to vector<4x1x32xf32>
    %127 = vector.shape_cast %126 : vector<4x1x32xf32> to vector<4x32xf32>
    %128 = tpu.concatenate %113, %115, %117, %119, %121, %123, %125, %127 in 1 : vector<4x32xf32>, vector<4x32xf32>, vector<4x32xf32>, vector<4x32xf32>, vector<4x32xf32>, vector<4x32xf32>, vector<4x32xf32>, vector<4x32xf32> -> vector<4x256xf32>
    %c0_52 = arith.constant 0 : index
    %c0_53 = arith.constant 0 : index
    %129 = vector.load %arg17[%c0_52, %c0_53] : memref<4x256xf32, #tpu.memory_space<vmem>>, vector<4x256xf32>
    tpu.vector_store %arg17[%c0_52, %c0_53], %128 {strides = array<i32>} : memref<4x256xf32, #tpu.memory_space<vmem>>, vector<4x256xf32>,
    return
  }
  func.func @transform_0(%arg0: i32) -> (i32, i32) {
    %c0_i32 = arith.constant 0 : i32
    %c0_i32_0 = arith.constant 0 : i32
    return %arg0, %c0_i32 : i32, i32
  }
  func.func @transform_1(%arg0: i32) -> (i32, i32, i32) {
    %c0_i32 = arith.constant 0 : i32
    %c0_i32_0 = arith.constant 0 : i32
    %c0_i32_1 = arith.constant 0 : i32
    return %arg0, %c0_i32, %c0_i32_0 : i32, i32, i32
  }
  func.func @transform_2(%arg0: i32) -> (i32, i32) {
    %c0_i32 = arith.constant 0 : i32
    %c0_i32_0 = arith.constant 0 : i32
    %c0_i32_1 = arith.constant 0 : i32
    return %c0_i32, %c0_i32_0 : i32, i32
  }
  func.func @transform_3(%arg0: i32) -> (i32, i32) {
    %c0_i32 = arith.constant 0 : i32
    %c0_i32_0 = arith.constant 0 : i32
    %c0_i32_1 = arith.constant 0 : i32
    return %c0_i32, %c0_i32_0 : i32, i32
  }
  func.func @transform_4(%arg0: i32) -> (i32, i32) {
    %c0_i32 = arith.constant 0 : i32
    %c0_i32_0 = arith.constant 0 : i32
    %c0_i32_1 = arith.constant 0 : i32
    return %c0_i32, %c0_i32_0 : i32, i32
  }
  func.func @transform_5(%arg0: i32) -> (i32, i32) {
    %c0_i32 = arith.constant 0 : i32
    %c0_i32_0 = arith.constant 0 : i32
    %c0_i32_1 = arith.constant 0 : i32
    return %c0_i32, %c0_i32_0 : i32, i32
  }
  func.func @transform_6(%arg0: i32) -> (i32, i32) {
    %c0_i32 = arith.constant 0 : i32
    %c0_i32_0 = arith.constant 0 : i32
    %c0_i32_1 = arith.constant 0 : i32
    return %c0_i32, %c0_i32_0 : i32, i32
  }
  func.func @transform_7(%arg0: i32) -> (i32, i32) {
    %c0_i32 = arith.constant 0 : i32
    %c0_i32_0 = arith.constant 0 : i32
    %c0_i32_1 = arith.constant 0 : i32
    return %c0_i32, %c0_i32_0 : i32, i32
  }
  func.func @transform_8(%arg0: i32) -> (i32, i32) {
    %c0_i32 = arith.constant 0 : i32
    %c0_i32_0 = arith.constant 0 : i32
    %c0_i32_1 = arith.constant 0 : i32
    return %c0_i32, %c0_i32_0 : i32, i32
  }
  func.func @transform_9(%arg0: i32) -> (i32, i32) {
    %c0_i32 = arith.constant 0 : i32
    %c0_i32_0 = arith.constant 0 : i32
    %c0_i32_1 = arith.constant 0 : i32
    return %c0_i32, %c0_i32_0 : i32, i32
  }
  func.func @transform_10(%arg0: i32) -> (i32, i32) {
    %c0_i32 = arith.constant 0 : i32
    %c0_i32_0 = arith.constant 0 : i32
    %c0_i32_1 = arith.constant 0 : i32
    return %c0_i32, %c0_i32_0 : i32, i32
  }
  func.func @transform_11(%arg0: i32) -> (i32, i32) {
    %c0_i32 = arith.constant 0 : i32
    %c0_i32_0 = arith.constant 0 : i32
    %c0_i32_1 = arith.constant 0 : i32
    return %c0_i32, %c0_i32_0 : i32, i32
  }
  func.func @transform_12(%arg0: i32) -> (i32, i32) {
    %c0_i32 = arith.constant 0 : i32
    %c0_i32_0 = arith.constant 0 : i32
    %c0_i32_1 = arith.constant 0 : i32
    return %c0_i32, %c0_i32_0 : i32, i32
  }
  func.func @transform_13(%arg0: i32) -> (i32, i32) {
    %c0_i32 = arith.constant 0 : i32
    %c0_i32_0 = arith.constant 0 : i32
    %c0_i32_1 = arith.constant 0 : i32
    return %c0_i32, %c0_i32_0 : i32, i32
  }
  func.func @transform_14(%arg0: i32) -> (i32, i32) {
    %c0_i32 = arith.constant 0 : i32
    %c0_i32_0 = arith.constant 0 : i32
    %c0_i32_1 = arith.constant 0 : i32
    return %c0_i32, %c0_i32_0 : i32, i32
  }
  func.func @transform_15(%arg0: i32) -> (i32, i32) {
    %c0_i32 = arith.constant 0 : i32
    %c0_i32_0 = arith.constant 0 : i32
    %c0_i32_1 = arith.constant 0 : i32
    return %c0_i32, %c0_i32_0 : i32, i32
  }
  func.func @transform_16(%arg0: i32) -> (i32, i32) {
    %c0_i32 = arith.constant 0 : i32
    %c0_i32_0 = arith.constant 0 : i32
    return %arg0, %c0_i32 : i32, i32
  }
}

</mosaic_0001>

<llo_original>
// kernel: tpu_custom_call.1
$region0: #{tpu_custom_call.1}
  #allocation0 [shape = 'u32[]', space=smem, size = 0x4, offset = 0x4, fixed_abs, tag = 'smem constant byte address 0x4 - core index']
  #allocation1 [shape = 'u32[144,128]{1,0:T(1,128)}', space=vmem, size = 0x12000, scoped, tag = 'internal scratch']
  %s0 = inlined_call_operand.vmem [shape: f32[32,32], index: 0, kind: input, shape index: {}]
  %s1 = inlined_call_operand.hbm [shape: f32[4,1,32], index: 1, kind: input, shape index: {}]
  %s2 = inlined_call_operand.vmem [shape: f32[32,32], index: 2, kind: input, shape index: {}]
  %s3 = inlined_call_operand.vmem [shape: f32[32,32], index: 3, kind: input, shape index: {}]
  %s4 = inlined_call_operand.vmem [shape: f32[1,32], index: 4, kind: input, shape index: {}]
  %s5 = inlined_call_operand.vmem [shape: f32[1,32], index: 5, kind: input, shape index: {}]
  %s6 = inlined_call_operand.hbm [shape: f32[32,96], index: 6, kind: input, shape index: {}]
  %s7 = inlined_call_operand.vmem [shape: f32[1,96], index: 7, kind: input, shape index: {}]
  %s8 = inlined_call_operand.hbm [shape: f32[32,32], index: 8, kind: input, shape index: {}]
  %s9 = inlined_call_operand.vmem [shape: f32[1,32], index: 9, kind: input, shape index: {}]
  %s10 = inlined_call_operand.vmem [shape: f32[1,32], index: 10, kind: input, shape index: {}]
  %s11 = inlined_call_operand.vmem [shape: f32[1,32], index: 11, kind: input, shape index: {}]
  %s12 = inlined_call_operand.hbm [shape: f32[32,64], index: 12, kind: input, shape index: {}]
  %s13 = inlined_call_operand.vmem [shape: f32[1,64], index: 13, kind: input, shape index: {}]
  %s14 = inlined_call_operand.vmem [shape: f32[64,32], index: 14, kind: input, shape index: {}]
  %s15 = inlined_call_operand.vmem [shape: f32[1,32], index: 15, kind: input, shape index: {}]
  %s16 = inlined_call_operand.hbm [shape: f32[4,256], index: 16, kind: output, shape index: {}]
  %s17 = sld [smem:[#allocation0]]
  $region90: #{tpu_custom_call.1} parent=0
    _
  %s19 = ssub.s32 1, %s17
  %s20 = scalar_select 0, %s19, %s17
  $region1: #{tpu_custom_call.1} parent=0
    #allocation2 [shape = 'u8[2048]{0}', space=vmem, size = 0x800, scoped, tag = 'input window, operand 1, single buffered']
    #allocation3 [shape = 's32[1]{0}', space=sflag, size = 0x4, scoped, tag = 'scoped memory for tpu_custom_call.1']
    #allocation4 [shape = 's32[1]{0}', space=sflag, size = 0x4, scoped, tag = 'scoped memory for tpu_custom_call.1']
    #allocation5 [shape = 'u8[16384]{0}', space=vmem, size = 0x4000, scoped, tag = 'input window, operand 6, single buffered']
    #allocation6 [shape = 's32[1]{0}', space=sflag, size = 0x4, scoped, tag = 'scoped memory for tpu_custom_call.1']
    #allocation7 [shape = 'u8[16384]{0}', space=vmem, size = 0x4000, scoped, tag = 'input window, operand 8, single buffered']
    #allocation8 [shape = 'u8[16384]{0}', space=vmem, size = 0x4000, scoped, tag = 'input window, operand 12, single buffered']
    #allocation9 [shape = 's32[1]{0}', space=sflag, size = 0x4, scoped, tag = 'scoped memory for tpu_custom_call.1']
    #allocation10 [shape = 'u8[4096]{0}', space=vmem, size = 0x1000, scoped, tag = 'output window, operand 0, single buffered']
    %21 = vsyncpa [#allocation3], 0
    %22 = vsyncpa [#allocation6], 0
    %23 = vsyncpa [#allocation9], 0
    %24 = vsyncpa [#allocation4], 0
    // Predicated region
    $region2: #{tpu_custom_call.1} parent=1 // pred_check
      _
    $region3: #{tpu_custom_call.1} parent=1 // pred_check_branch
      %26 = sbr.rel (0) target = $region5
    $region4: #{tpu_custom_call.1} parent=1 // pred_region
      _
    $region5: #{tpu_custom_call.1} parent=1 // pred_fallthru
      _
    // Predicated region
    $region6: #{tpu_custom_call.1} parent=1 // pred_check
      _
    $region7: #{tpu_custom_call.1} parent=1 // pred_check_branch
      %28 = sbr.rel (0) target = $region9
    $region8: #{tpu_custom_call.1} parent=1 // pred_region
      %s30 = ssub.s32 64, 64
      %31 = vsyncadd [#allocation3], %s30
      %s32 = sshll.u32 [#allocation2], 4
      %s33 = int_to_ptr.vmem [resolvable:$true] %s32
      %38 = dma.hbm_to_vmem [thread:$0]  %s1, 64, %s33, [#allocation3], 16, 16, 1
    $region9: #{tpu_custom_call.1} parent=1 // pred_fallthru
      _
    // Predicated region
    $region10: #{tpu_custom_call.1} parent=1 // pred_check
      _
    $region11: #{tpu_custom_call.1} parent=1 // pred_check_branch
      %40 = sbr.rel (0) target = $region13
    $region12: #{tpu_custom_call.1} parent=1 // pred_region
      _
    $region13: #{tpu_custom_call.1} parent=1 // pred_fallthru
      _
    // Predicated region
    $region14: #{tpu_custom_call.1} parent=1 // pred_check
      _
    $region15: #{tpu_custom_call.1} parent=1 // pred_check_branch
      %42 = sbr.rel (0) target = $region17
    $region16: #{tpu_custom_call.1} parent=1 // pred_region
      _
    $region17: #{tpu_custom_call.1} parent=1 // pred_fallthru
      _
    // Predicated region
    $region18: #{tpu_custom_call.1} parent=1 // pred_check
      _
    $region19: #{tpu_custom_call.1} parent=1 // pred_check_branch
      %44 = sbr.rel (0) target = $region21
    $region20: #{tpu_custom_call.1} parent=1 // pred_region
      _
    $region21: #{tpu_custom_call.1} parent=1 // pred_fallthru
      _
    // Predicated region
    $region22: #{tpu_custom_call.1} parent=1 // pred_check
      _
    $region23: #{tpu_custom_call.1} parent=1 // pred_check_branch
      %46 = sbr.rel (0) target = $region25
    $region24: #{tpu_custom_call.1} parent=1 // pred_region
      _
    $region25: #{tpu_custom_call.1} parent=1 // pred_fallthru
      _
    // Predicated region
    $region26: #{tpu_custom_call.1} parent=1 // pred_check
      _
    $region27: #{tpu_custom_call.1} parent=1 // pred_check_branch
      %48 = sbr.rel (0) target = $region29
    $region28: #{tpu_custom_call.1} parent=1 // pred_region
      %s50 = ssub.s32 512, 512
      %51 = vsyncadd [#allocation6], %s50
      %s52 = sshll.u32 [#allocation5], 4
      %s53 = int_to_ptr.vmem [resolvable:$true] %s52
      %58 = dma.hbm_to_vmem [thread:$0]  %s6, 512, %s53, [#allocation6], 128, 128, 8
    $region29: #{tpu_custom_call.1} parent=1 // pred_fallthru
      _
    // Predicated region
    $region30: #{tpu_custom_call.1} parent=1 // pred_check
      _
    $region31: #{tpu_custom_call.1} parent=1 // pred_check_branch
      %60 = sbr.rel (0) target = $region33
    $region32: #{tpu_custom_call.1} parent=1 // pred_region
      _
    $region33: #{tpu_custom_call.1} parent=1 // pred_fallthru
      _
    // Predicated region
    $region34: #{tpu_custom_call.1} parent=1 // pred_check
      _
    $region35: #{tpu_custom_call.1} parent=1 // pred_check_branch
      %62 = sbr.rel (0) target = $region37
    $region36: #{tpu_custom_call.1} parent=1 // pred_region
      %s64 = ssub.s32 512, 512
      %65 = vsyncadd [#allocation6], %s64
      %s66 = sshll.u32 [#allocation7], 4
      %s67 = int_to_ptr.vmem [resolvable:$true] %s66
      %72 = dma.hbm_to_vmem [thread:$0]  %s8, 512, %s67, [#allocation6], 128, 128, 8
    $region37: #{tpu_custom_call.1} parent=1 // pred_fallthru
      _
    // Predicated region
    $region38: #{tpu_custom_call.1} parent=1 // pred_check
      _
    $region39: #{tpu_custom_call.1} parent=1 // pred_check_branch
      %74 = sbr.rel (0) target = $region41
    $region40: #{tpu_custom_call.1} parent=1 // pred_region
      _
    $region41: #{tpu_custom_call.1} parent=1 // pred_fallthru
      _
    // Predicated region
    $region42: #{tpu_custom_call.1} parent=1 // pred_check
      _
    $region43: #{tpu_custom_call.1} parent=1 // pred_check_branch
      %76 = sbr.rel (0) target = $region45
    $region44: #{tpu_custom_call.1} parent=1 // pred_region
      _
    $region45: #{tpu_custom_call.1} parent=1 // pred_fallthru
      _
    // Predicated region
    $region46: #{tpu_custom_call.1} parent=1 // pred_check
      _
    $region47: #{tpu_custom_call.1} parent=1 // pred_check_branch
      %78 = sbr.rel (0) target = $region49
    $region48: #{tpu_custom_call.1} parent=1 // pred_region
      _
    $region49: #{tpu_custom_call.1} parent=1 // pred_fallthru
      _
    // Predicated region
    $region50: #{tpu_custom_call.1} parent=1 // pred_check
      _
    $region51: #{tpu_custom_call.1} parent=1 // pred_check_branch
      %80 = sbr.rel (0) target = $region53
    $region52: #{tpu_custom_call.1} parent=1 // pred_region
      %s82 = ssub.s32 512, 512
      %83 = vsyncadd [#allocation9], %s82
      %s84 = sshll.u32 [#allocation8], 4
      %s85 = int_to_ptr.vmem [resolvable:$true] %s84
      %90 = dma.hbm_to_vmem [thread:$0]  %s12, 512, %s85, [#allocation9], 128, 128, 8
    $region53: #{tpu_custom_call.1} parent=1 // pred_fallthru
      _
    // Predicated region
    $region54: #{tpu_custom_call.1} parent=1 // pred_check
      _
    $region55: #{tpu_custom_call.1} parent=1 // pred_check_branch
      %92 = sbr.rel (0) target = $region57
    $region56: #{tpu_custom_call.1} parent=1 // pred_region
      _
    $region57: #{tpu_custom_call.1} parent=1 // pred_fallthru
      _
    // Predicated region
    $region58: #{tpu_custom_call.1} parent=1 // pred_check
      _
    $region59: #{tpu_custom_call.1} parent=1 // pred_check_branch
      %94 = sbr.rel (0) target = $region61
    $region60: #{tpu_custom_call.1} parent=1 // pred_region
      _
    $region61: #{tpu_custom_call.1} parent=1 // pred_fallthru
      _
    // Predicated region
    $region62: #{tpu_custom_call.1} parent=1 // pred_check
      _
    $region63: #{tpu_custom_call.1} parent=1 // pred_check_branch
      %96 = sbr.rel (0) target = $region65
    $region64: #{tpu_custom_call.1} parent=1 // pred_region
      _
    $region65: #{tpu_custom_call.1} parent=1 // pred_fallthru
      _
    // Predicated region
    $region66: #{tpu_custom_call.1} parent=1 // pred_check
      _
    $region67: #{tpu_custom_call.1} parent=1 // pred_check_branch
      %98 = sbr.rel (0) target = $region69
    $region68: #{tpu_custom_call.1} parent=1 // pred_region
      %99 = dma.done [#allocation3], 64
    $region69: #{tpu_custom_call.1} parent=1 // pred_fallthru
      _
    // Predicated region
    $region70: #{tpu_custom_call.1} parent=1 // pred_check
      _
    $region71: #{tpu_custom_call.1} parent=1 // pred_check_branch
      %101 = sbr.rel (0) target = $region73
    $region72: #{tpu_custom_call.1} parent=1 // pred_region
      %102 = dma.done [#allocation6], 512
    $region73: #{tpu_custom_call.1} parent=1 // pred_fallthru
      _
    // Predicated region
    $region74: #{tpu_custom_call.1} parent=1 // pred_check
      _
    $region75: #{tpu_custom_call.1} parent=1 // pred_check_branch
      %104 = sbr.rel (0) target = $region77
    $region76: #{tpu_custom_call.1} parent=1 // pred_region
      %105 = dma.done [#allocation6], 512
    $region77: #{tpu_custom_call.1} parent=1 // pred_fallthru
      _
    // Predicated region
    $region78: #{tpu_custom_call.1} parent=1 // pred_check
      _
    $region79: #{tpu_custom_call.1} parent=1 // pred_check_branch
      %107 = sbr.rel (0) target = $region81
    $region80: #{tpu_custom_call.1} parent=1 // pred_region
      %108 = dma.done [#allocation9], 512
    $region81: #{tpu_custom_call.1} parent=1 // pred_fallthru
      _
    %v109 = vld [vmem:[%s0] sm:$0xff]
    %v110 = vld [vmem:[%s0 + $0x8] sm:$0xff]
    %v111 = vld [vmem:[%s0 + $0x10] sm:$0xff]
    %v112 = vld [vmem:[%s0 + $0x18] sm:$0xff]
    %v113 = vld [vmem:[#allocation2] sm:$0x1]
    %v114 = vld [vmem:[#allocation2 + $0x1] sm:$0x1]
    %v115 = vld [vmem:[#allocation2 + $0x2] sm:$0x1]
    %v116 = vld [vmem:[#allocation2 + $0x3] sm:$0x1]
    %v117 = vld [vmem:[%s2] sm:$0xff]
    %v118 = vld [vmem:[%s2 + $0x8] sm:$0xff]
    %v119 = vld [vmem:[%s2 + $0x10] sm:$0xff]
    %v120 = vld [vmem:[%s2 + $0x18] sm:$0xff]
    %v121 = vld [vmem:[%s3] sm:$0xff]
    %v122 = vld [vmem:[%s3 + $0x8] sm:$0xff]
    %v123 = vld [vmem:[%s3 + $0x10] sm:$0xff]
    %v124 = vld [vmem:[%s3 + $0x18] sm:$0xff]
    %v125 = vsub.f32 %v113, 1.0
    %v126 = vsub.f32 %v114, 1.0
    %v127 = vsub.f32 %v115, 1.0
    %v128 = vsub.f32 %v116, 1.0
    %v129 = vmul.f32 %v125, 1e+09
    %v130 = vmul.f32 %v126, 1e+09
    %v131 = vmul.f32 %v127, 1e+09
    %v132 = vmul.f32 %v128, 1e+09
    %v133 = vld [vmem:[%s4] sm:$0x1]
    %v134 = vld [vmem:[%s5] sm:$0x1]
    %vm135 = vcmask 261120
    %v136 = vsel %vm135, %v109, 0.0
    %137 = vadd.xlane.f32.xlu0 %v136
    %v138 = vpop.xlane.xlu0 %137
    %v139 = vsel %vm135, %v110, 0.0
    %140 = vadd.xlane.f32.xlu0 %v139
    %v141 = vpop.xlane.xlu0 %140
    %v142 = vsel %vm135, %v111, 0.0
    %143 = vadd.xlane.f32.xlu0 %v142
    %v144 = vpop.xlane.xlu0 %143
    %v145 = vsel %vm135, %v112, 0.0
    %146 = vadd.xlane.f32.xlu0 %v145
    %v147 = vpop.xlane.xlu0 %146
    %v148 = vrcp.pop 32.0
    %v149 = vmul.f32 %v138, %v148
    %v150 = vmul.f32 %v141, %v148
    %v151 = vmul.f32 %v144, %v148
    %v152 = vmul.f32 %v147, %v148
    %v153 = vsub.f32 %v109, %v149
    %v154 = vsub.f32 %v110, %v150
    %v155 = vsub.f32 %v111, %v151
    %v156 = vsub.f32 %v112, %v152
    %v157 = vmul.f32 %v153, %v153
    %v158 = vmul.f32 %v154, %v154
    %v159 = vmul.f32 %v155, %v155
    %v160 = vmul.f32 %v156, %v156
    %v161 = vsel %vm135, %v157, 0.0
    %162 = vadd.xlane.f32.xlu0 %v161
    %v163 = vpop.xlane.xlu0 %162
    %v164 = vsel %vm135, %v158, 0.0
    %165 = vadd.xlane.f32.xlu0 %v164
    %v166 = vpop.xlane.xlu0 %165
    %v167 = vsel %vm135, %v159, 0.0
    %168 = vadd.xlane.f32.xlu0 %v167
    %v169 = vpop.xlane.xlu0 %168
    %v170 = vsel %vm135, %v160, 0.0
    %171 = vadd.xlane.f32.xlu0 %v170
    %v172 = vpop.xlane.xlu0 %171
    %v173 = vmul.f32 %v163, %v148
    %v174 = vmul.f32 %v166, %v148
    %v175 = vmul.f32 %v169, %v148
    %v176 = vmul.f32 %v172, %v148
    %v177 = vadd.f32 %v173, 1e-05
    %v178 = vadd.f32 %v174, 1e-05
    %v179 = vadd.f32 %v175, 1e-05
    %v180 = vadd.f32 %v176, 1e-05
    %v181 = vrsqrt.pop %v177
    %v182 = vrsqrt.pop %v178
    %v183 = vrsqrt.pop %v179
    %v184 = vrsqrt.pop %v180
    %v185 = vmul.f32 %v153, %v181
    %v186 = vmul.f32 %v154, %v182
    %v187 = vmul.f32 %v155, %v183
    %v188 = vmul.f32 %v156, %v184
    %v190 = vlaneseq
    %v191 = vshrl.u32 %v190, 7
    %v192 = vsub.s32 0, %v191
    %v193 = vrot.slane %v133, %v192
    %v195 = vmul.f32 %v185, %v193
    %v196 = vmul.f32 %v186, %v193
    %v197 = vmul.f32 %v187, %v193
    %v198 = vmul.f32 %v188, %v193
    %v200 = vlaneseq
    %v201 = vshrl.u32 %v200, 7
    %v202 = vsub.s32 0, %v201
    %v203 = vrot.slane %v134, %v202
    %v205 = vadd.f32 %v195, %v203
    %v206 = vadd.f32 %v196, %v203
    %v207 = vadd.f32 %v197, %v203
    %v208 = vadd.f32 %v198, %v203
    %v209 = vld [vmem:[#allocation5] sm:$0xff]
    %v210 = vld [vmem:[#allocation5 + $0x8] sm:$0xff]
    %v211 = vld [vmem:[#allocation5 + $0x10] sm:$0xff]
    %v212 = vld [vmem:[#allocation5 + $0x18] sm:$0xff]
    %v213 = vld [vmem:[%s7] sm:$0x1]
    %v215 = vlaneseq
    %v216 = vshrl.u32 %v215, 7
    %v217 = vsub.s32 0, %v216
    %v218 = vrot.slane %v213, %v217
    %v221 = vsel %vm135, %v205, 0
    %v224 = vsel %vm135, %v206, 0
    %v227 = vsel %vm135, %v207, 0
    %v230 = vsel %vm135, %v208, 0
    %232 = vmatprep.subr.mxu0 0.0
    %233 = vmatpush1.msra.mxu0 %v209
    %234 = vmatprep.subr.mxu0 0.0
    %235 = vmatpush1.msra.mxu0 %v210
    %236 = vmatprep.subr.mxu0 0.0
    %237 = vmatpush1.msra.mxu0 %v211
    %238 = vmatprep.subr.mxu0 0.0
    %239 = vmatpush1.msra.mxu0 %v212
    %240 = vmatprep.subr.mxu0 0.0
    %241 = vmatpush1.msra.mxu0 0.0
    %242 = vmatprep.subr.mxu0 0.0
    %243 = vmatpush1.msra.mxu0 0.0
    %244 = vmatprep.subr.mxu0 0.0
    %245 = vmatpush1.msra.mxu0 0.0
    %246 = vmatprep.subr.mxu0 0.0
    %247 = vmatpush1.msra.mxu0 0.0
    %248 = vmatprep.subr.mxu0 0.0
    %249 = vmatpush1.msra.mxu0 0.0
    %250 = vmatprep.subr.mxu0 0.0
    %251 = vmatpush1.msra.mxu0 0.0
    %252 = vmatprep.subr.mxu0 0.0
    %253 = vmatpush1.msra.mxu0 0.0
    %254 = vmatprep.subr.mxu0 0.0
    %255 = vmatpush1.msra.mxu0 0.0
    %256 = vmatprep.subr.mxu0 0.0
    %257 = vmatpush1.msra.mxu0 0.0
    %258 = vmatprep.subr.mxu0 0.0
    %259 = vmatpush1.msra.mxu0 0.0
    %260 = vmatprep.subr.mxu0 0.0
    %261 = vmatpush1.msra.mxu0 0.0
    %262 = vmatprep.subr.mxu0 0.0
    %263 = vmatpush1.msra.mxu0 0.0
    %264 = vmatprep.subr.mxu0 0.0
    %265 = vmatpush1.msra.mxu0 0.0
    %266 = vmatprep.subr.mxu0 0.0
    %267 = vmatpush1.msra.mxu0 0.0
    %268 = vmatprep.subr.mxu0 0.0
    %269 = vmatpush1.msra.mxu0 0.0
    %270 = vmatprep.subr.mxu0 0.0
    %271 = vmatpush1.msra.mxu0 0.0
    %272 = vmatprep.subr.mxu0 0.0
    %273 = vmatpush1.msra.mxu0 0.0
    %274 = vmatprep.subr.mxu0 0.0
    %275 = vmatpush1.msra.mxu0 0.0
    %276 = vmatprep.subr.mxu0 0.0
    %277 = vmatpush1.msra.mxu0 0.0
    %278 = vmatprep.subr.mxu0 0.0
    %279 = vmatpush1.msra.mxu0 0.0
    %280 = vmatprep.subr.mxu0 0.0
    %281 = vmatpush1.msra.mxu0 0.0
    %282 = vmatprep.subr.mxu0 0.0
    %283 = vmatpush1.msra.mxu0 0.0
    %284 = vmatprep.subr.mxu0 0.0
    %285 = vmatpush1.msra.mxu0 0.0
    %286 = vmatprep.subr.mxu0 0.0
    %287 = vmatpush1.msra.mxu0 0.0
    %288 = vmatprep.subr.mxu0 0.0
    %289 = vmatpush1.msra.mxu0 0.0
    %290 = vmatprep.subr.mxu0 0.0
    %291 = vmatpush1.msra.mxu0 0.0
    %292 = vmatprep.subr.mxu0 0.0
    %293 = vmatpush1.msra.mxu0 0.0
    %294 = vmatprep.subr.mxu0 0.0
    %295 = vmatpush1.msra.mxu0 0.0
    %296 = vmatprep.mubr.f32.mxu0 0.0
    %297 = vmatmul.mubr.f32.gmra.mrb[0].mxu0 %v221
    %v298 = vpop.f32.mrb[0].mxu0
    %v299 = vadd.f32 %v218, %v298
    %v300 = vpop.f32.mrb[0].mxu0
    %301 = vmatprep.mubr.f32.mxu0 0.0
    %302 = vmatmul.mubr.f32.gmra.mrb[0].mxu0 %v224
    %v303 = vpop.f32.mrb[0].mxu0
    %v304 = vadd.f32 %v218, %v303
    %v305 = vpop.f32.mrb[0].mxu0
    %306 = vmatprep.mubr.f32.mxu0 0.0
    %307 = vmatmul.mubr.f32.gmra.mrb[0].mxu0 %v227
    %v308 = vpop.f32.mrb[0].mxu0
    %v309 = vadd.f32 %v218, %v308
    %v310 = vpop.f32.mrb[0].mxu0
    %311 = vmatprep.mubr.f32.mxu0 0.0
    %312 = vmatmul.mubr.f32.gmra.mrb[0].mxu0 %v230
    %v313 = vpop.f32.mrb[0].mxu0
    %v314 = vadd.f32 %v218, %v313
    %v315 = vpop.f32.mrb[0].mxu0
    %316 = vdwg.mxu0
    %321 = vrot.lane.b32.xlu0 %v117, 32
    %v322 = vpop.permute.xlu0 %321
    %323 = vrot.lane.b32.xlu0 %v118, 32
    %v324 = vpop.permute.xlu0 %323
    %325 = vrot.lane.b32.xlu0 %v119, 32
    %v326 = vpop.permute.xlu0 %325
    %327 = vrot.lane.b32.xlu0 %v120, 32
    %v328 = vpop.permute.xlu0 %327
    %v333 = vmul.f32 %v299, %v322
    %v334 = vmul.f32 %v299, %v324
    %v335 = vmul.f32 %v299, %v326
    %v336 = vmul.f32 %v299, %v328
    %v337 = vmul.f32 %v304, %v322
    %v338 = vmul.f32 %v304, %v324
    %v339 = vmul.f32 %v304, %v326
    %v340 = vmul.f32 %v304, %v328
    %v341 = vmul.f32 %v309, %v322
    %v342 = vmul.f32 %v309, %v324
    %v343 = vmul.f32 %v309, %v326
    %v344 = vmul.f32 %v309, %v328
    %v345 = vmul.f32 %v314, %v322
    %v346 = vmul.f32 %v314, %v324
    %v347 = vmul.f32 %v314, %v326
    %v348 = vmul.f32 %v314, %v328
    %349 = vrot.lane.b32.xlu0 %v117, 64
    %v350 = vpop.permute.xlu0 %349
    %351 = vrot.lane.b32.xlu0 %v118, 64
    %v352 = vpop.permute.xlu0 %351
    %353 = vrot.lane.b32.xlu0 %v119, 64
    %v354 = vpop.permute.xlu0 %353
    %355 = vrot.lane.b32.xlu0 %v120, 64
    %v356 = vpop.permute.xlu0 %355
    %v361 = vmul.f32 %v299, %v350
    %v362 = vmul.f32 %v299, %v352
    %v363 = vmul.f32 %v299, %v354
    %v364 = vmul.f32 %v299, %v356
    %v365 = vmul.f32 %v304, %v350
    %v366 = vmul.f32 %v304, %v352
    %v367 = vmul.f32 %v304, %v354
    %v368 = vmul.f32 %v304, %v356
    %v369 = vmul.f32 %v309, %v350
    %v370 = vmul.f32 %v309, %v352
    %v371 = vmul.f32 %v309, %v354
    %v372 = vmul.f32 %v309, %v356
    %v373 = vmul.f32 %v314, %v350
    %v374 = vmul.f32 %v314, %v352
    %v375 = vmul.f32 %v314, %v354
    %v376 = vmul.f32 %v314, %v356
    %v381 = vlaneseq
    %v382 = vshrl.u32 %v381, 7
    %v383 = vsub.s32 0, %v382
    %v384 = vrot.slane %v129, %v383
    %v385 = vlaneseq
    %v386 = vshrl.u32 %v385, 7
    %v387 = vsub.s32 0, %v386
    %v388 = vrot.slane %v130, %v387
    %v389 = vlaneseq
    %v390 = vshrl.u32 %v389, 7
    %v391 = vsub.s32 0, %v390
    %v392 = vrot.slane %v131, %v391
    %v393 = vlaneseq
    %v394 = vshrl.u32 %v393, 7
    %v395 = vsub.s32 0, %v394
    %v396 = vrot.slane %v132, %v395
    %405 = vrot.lane.b32.xlu0 %v333, 96
    %v406 = vpop.permute.xlu0 %405
    %407 = vrot.lane.b32.xlu0 %v334, 96
    %v408 = vpop.permute.xlu0 %407
    %409 = vrot.lane.b32.xlu0 %v335, 96
    %v410 = vpop.permute.xlu0 %409
    %411 = vrot.lane.b32.xlu0 %v336, 96
    %v412 = vpop.permute.xlu0 %411
    %v414 = vsel %vm135, %v299, 0
    %v416 = vsel %vm135, %v406, 0
    %v418 = vsel %vm135, %v408, 0
    %v420 = vsel %vm135, %v410, 0
    %v422 = vsel %vm135, %v412, 0
    %424 = vmatprep.subr.mxu0 0.0
    %425 = vmatpush1.xpose.msra.mxu0 %v416
    %426 = vmatprep.subr.mxu0 0.0
    %427 = vmatpush1.xpose.msra.mxu0 %v418
    %428 = vmatprep.subr.mxu0 0.0
    %429 = vmatpush1.xpose.msra.mxu0 %v420
    %430 = vmatprep.subr.mxu0 0.0
    %431 = vmatpush1.xpose.msra.mxu0 %v422
    %432 = vmatprep.subr.mxu0 0.0
    %433 = vmatpush1.xpose.msra.mxu0 0.0
    %434 = vmatprep.subr.mxu0 0.0
    %435 = vmatpush1.xpose.msra.mxu0 0.0
    %436 = vmatprep.subr.mxu0 0.0
    %437 = vmatpush1.xpose.msra.mxu0 0.0
    %438 = vmatprep.subr.mxu0 0.0
    %439 = vmatpush1.xpose.msra.mxu0 0.0
    %440 = vmatprep.subr.mxu0 0.0
    %441 = vmatpush1.xpose.msra.mxu0 0.0
    %442 = vmatprep.subr.mxu0 0.0
    %443 = vmatpush1.xpose.msra.mxu0 0.0
    %444 = vmatprep.subr.mxu0 0.0
    %445 = vmatpush1.xpose.msra.mxu0 0.0
    %446 = vmatprep.subr.mxu0 0.0
    %447 = vmatpush1.xpose.msra.mxu0 0.0
    %448 = vmatprep.subr.mxu0 0.0
    %449 = vmatpush1.xpose.msra.mxu0 0.0
    %450 = vmatprep.subr.mxu0 0.0
    %451 = vmatpush1.xpose.msra.mxu0 0.0
    %452 = vmatprep.subr.mxu0 0.0
    %453 = vmatpush1.xpose.msra.mxu0 0.0
    %454 = vmatprep.subr.mxu0 0.0
    %455 = vmatpush1.xpose.msra.mxu0 0.0
    %456 = vmatprep.subr.mxu0 0.0
    %457 = vmatpush1.xpose.msra.mxu0 0.0
    %458 = vmatprep.subr.mxu0 0.0
    %459 = vmatpush1.xpose.msra.mxu0 0.0
    %460 = vmatprep.subr.mxu0 0.0
    %461 = vmatpush1.xpose.msra.mxu0 0.0
    %462 = vmatprep.subr.mxu0 0.0
    %463 = vmatpush1.xpose.msra.mxu0 0.0
    %464 = vmatprep.subr.mxu0 0.0
    %465 = vmatpush1.xpose.msra.mxu0 0.0
    %466 = vmatprep.subr.mxu0 0.0
    %467 = vmatpush1.xpose.msra.mxu0 0.0
    %468 = vmatprep.subr.mxu0 0.0
    %469 = vmatpush1.xpose.msra.mxu0 0.0
    %470 = vmatprep.subr.mxu0 0.0
    %471 = vmatpush1.xpose.msra.mxu0 0.0
    %472 = vmatprep.subr.mxu0 0.0
    %473 = vmatpush1.xpose.msra.mxu0 0.0
    %474 = vmatprep.subr.mxu0 0.0
    %475 = vmatpush1.xpose.msra.mxu0 0.0
    %476 = vmatprep.subr.mxu0 0.0
    %477 = vmatpush1.xpose.msra.mxu0 0.0
    %478 = vmatprep.subr.mxu0 0.0
    %479 = vmatpush1.xpose.msra.mxu0 0.0
    %480 = vmatprep.subr.mxu0 0.0
    %481 = vmatpush1.xpose.msra.mxu0 0.0
    %482 = vmatprep.subr.mxu0 0.0
    %483 = vmatpush1.xpose.msra.mxu0 0.0
    %484 = vmatprep.subr.mxu0 0.0
    %485 = vmatpush1.xpose.msra.mxu0 0.0
    %486 = vmatprep.subr.mxu0 0.0
    %487 = vmatpush1.xpose.msra.mxu0 0.0
    %488 = vmatprep.mubr.f32.mxu0 0.0
    %489 = vmatmul.mubr.f32.gmra.mrb[0].mxu0 %v414
    %v490 = vpop.f32.mrb[0].mxu0
    %v491 = vadd.f32 %v384, %v490
    %v492 = vpop.f32.mrb[0].mxu0
    %493 = vdwg.mxu0
    %498 = vrot.lane.b32.xlu0 %v337, 96
    %v499 = vpop.permute.xlu0 %498
    %500 = vrot.lane.b32.xlu0 %v338, 96
    %v501 = vpop.permute.xlu0 %500
    %502 = vrot.lane.b32.xlu0 %v339, 96
    %v503 = vpop.permute.xlu0 %502
    %504 = vrot.lane.b32.xlu0 %v340, 96
    %v505 = vpop.permute.xlu0 %504
    %v507 = vsel %vm135, %v304, 0
    %v509 = vsel %vm135, %v499, 0
    %v511 = vsel %vm135, %v501, 0
    %v513 = vsel %vm135, %v503, 0
    %v515 = vsel %vm135, %v505, 0
    %517 = vmatprep.subr.mxu0 0.0
    %518 = vmatpush1.xpose.msra.mxu0 %v509
    %519 = vmatprep.subr.mxu0 0.0
    %520 = vmatpush1.xpose.msra.mxu0 %v511
    %521 = vmatprep.subr.mxu0 0.0
    %522 = vmatpush1.xpose.msra.mxu0 %v513
    %523 = vmatprep.subr.mxu0 0.0
    %524 = vmatpush1.xpose.msra.mxu0 %v515
    %525 = vmatprep.subr.mxu0 0.0
    %526 = vmatpush1.xpose.msra.mxu0 0.0
    %527 = vmatprep.subr.mxu0 0.0
    %528 = vmatpush1.xpose.msra.mxu0 0.0
    %529 = vmatprep.subr.mxu0 0.0
    %530 = vmatpush1.xpose.msra.mxu0 0.0
    %531 = vmatprep.subr.mxu0 0.0
    %532 = vmatpush1.xpose.msra.mxu0 0.0
    %533 = vmatprep.subr.mxu0 0.0
    %534 = vmatpush1.xpose.msra.mxu0 0.0
    %535 = vmatprep.subr.mxu0 0.0
    %536 = vmatpush1.xpose.msra.mxu0 0.0
    %537 = vmatprep.subr.mxu0 0.0
    %538 = vmatpush1.xpose.msra.mxu0 0.0
    %539 = vmatprep.subr.mxu0 0.0
    %540 = vmatpush1.xpose.msra.mxu0 0.0
    %541 = vmatprep.subr.mxu0 0.0
    %542 = vmatpush1.xpose.msra.mxu0 0.0
    %543 = vmatprep.subr.mxu0 0.0
    %544 = vmatpush1.xpose.msra.mxu0 0.0
    %545 = vmatprep.subr.mxu0 0.0
    %546 = vmatpush1.xpose.msra.mxu0 0.0
    %547 = vmatprep.subr.mxu0 0.0
    %548 = vmatpush1.xpose.msra.mxu0 0.0
    %549 = vmatprep.subr.mxu0 0.0
    %550 = vmatpush1.xpose.msra.mxu0 0.0
    %551 = vmatprep.subr.mxu0 0.0
    %552 = vmatpush1.xpose.msra.mxu0 0.0
    %553 = vmatprep.subr.mxu0 0.0
    %554 = vmatpush1.xpose.msra.mxu0 0.0
    %555 = vmatprep.subr.mxu0 0.0
    %556 = vmatpush1.xpose.msra.mxu0 0.0
    %557 = vmatprep.subr.mxu0 0.0
    %558 = vmatpush1.xpose.msra.mxu0 0.0
    %559 = vmatprep.subr.mxu0 0.0
    %560 = vmatpush1.xpose.msra.mxu0 0.0
    %561 = vmatprep.subr.mxu0 0.0
    %562 = vmatpush1.xpose.msra.mxu0 0.0
    %563 = vmatprep.subr.mxu0 0.0
    %564 = vmatpush1.xpose.msra.mxu0 0.0
    %565 = vmatprep.subr.mxu0 0.0
    %566 = vmatpush1.xpose.msra.mxu0 0.0
    %567 = vmatprep.subr.mxu0 0.0
    %568 = vmatpush1.xpose.msra.mxu0 0.0
    %569 = vmatprep.subr.mxu0 0.0
    %570 = vmatpush1.xpose.msra.mxu0 0.0
    %571 = vmatprep.subr.mxu0 0.0
    %572 = vmatpush1.xpose.msra.mxu0 0.0
    %573 = vmatprep.subr.mxu0 0.0
    %574 = vmatpush1.xpose.msra.mxu0 0.0
    %575 = vmatprep.subr.mxu0 0.0
    %576 = vmatpush1.xpose.msra.mxu0 0.0
    %577 = vmatprep.subr.mxu0 0.0
    %578 = vmatpush1.xpose.msra.mxu0 0.0
    %579 = vmatprep.subr.mxu0 0.0
    %580 = vmatpush1.xpose.msra.mxu0 0.0
    %581 = vmatprep.mubr.f32.mxu0 0.0
    %582 = vmatmul.mubr.f32.gmra.mrb[0].mxu0 %v507
    %v583 = vpop.f32.mrb[0].mxu0
    %v584 = vadd.f32 %v388, %v583
    %v585 = vpop.f32.mrb[0].mxu0
    %586 = vdwg.mxu0
    %591 = vrot.lane.b32.xlu0 %v341, 96
    %v592 = vpop.permute.xlu0 %591
    %593 = vrot.lane.b32.xlu0 %v342, 96
    %v594 = vpop.permute.xlu0 %593
    %595 = vrot.lane.b32.xlu0 %v343, 96
    %v596 = vpop.permute.xlu0 %595
    %597 = vrot.lane.b32.xlu0 %v344, 96
    %v598 = vpop.permute.xlu0 %597
    %v600 = vsel %vm135, %v309, 0
    %v602 = vsel %vm135, %v592, 0
    %v604 = vsel %vm135, %v594, 0
    %v606 = vsel %vm135, %v596, 0
    %v608 = vsel %vm135, %v598, 0
    %610 = vmatprep.subr.mxu0 0.0
    %611 = vmatpush1.xpose.msra.mxu0 %v602
    %612 = vmatprep.subr.mxu0 0.0
    %613 = vmatpush1.xpose.msra.mxu0 %v604
    %614 = vmatprep.subr.mxu0 0.0
    %615 = vmatpush1.xpose.msra.mxu0 %v606
    %616 = vmatprep.subr.mxu0 0.0
    %617 = vmatpush1.xpose.msra.mxu0 %v608
    %618 = vmatprep.subr.mxu0 0.0
    %619 = vmatpush1.xpose.msra.mxu0 0.0
    %620 = vmatprep.subr.mxu0 0.0
    %621 = vmatpush1.xpose.msra.mxu0 0.0
    %622 = vmatprep.subr.mxu0 0.0
    %623 = vmatpush1.xpose.msra.mxu0 0.0
    %624 = vmatprep.subr.mxu0 0.0
    %625 = vmatpush1.xpose.msra.mxu0 0.0
    %626 = vmatprep.subr.mxu0 0.0
    %627 = vmatpush1.xpose.msra.mxu0 0.0
    %628 = vmatprep.subr.mxu0 0.0
    %629 = vmatpush1.xpose.msra.mxu0 0.0
    %630 = vmatprep.subr.mxu0 0.0
    %631 = vmatpush1.xpose.msra.mxu0 0.0
    %632 = vmatprep.subr.mxu0 0.0
    %633 = vmatpush1.xpose.msra.mxu0 0.0
    %634 = vmatprep.subr.mxu0 0.0
    %635 = vmatpush1.xpose.msra.mxu0 0.0
    %636 = vmatprep.subr.mxu0 0.0
    %637 = vmatpush1.xpose.msra.mxu0 0.0
    %638 = vmatprep.subr.mxu0 0.0
    %639 = vmatpush1.xpose.msra.mxu0 0.0
    %640 = vmatprep.subr.mxu0 0.0
    %641 = vmatpush1.xpose.msra.mxu0 0.0
    %642 = vmatprep.subr.mxu0 0.0
    %643 = vmatpush1.xpose.msra.mxu0 0.0
    %644 = vmatprep.subr.mxu0 0.0
    %645 = vmatpush1.xpose.msra.mxu0 0.0
    %646 = vmatprep.subr.mxu0 0.0
    %647 = vmatpush1.xpose.msra.mxu0 0.0
    %648 = vmatprep.subr.mxu0 0.0
    %649 = vmatpush1.xpose.msra.mxu0 0.0
    %650 = vmatprep.subr.mxu0 0.0
    %651 = vmatpush1.xpose.msra.mxu0 0.0
    %652 = vmatprep.subr.mxu0 0.0
    %653 = vmatpush1.xpose.msra.mxu0 0.0
    %654 = vmatprep.subr.mxu0 0.0
    %655 = vmatpush1.xpose.msra.mxu0 0.0
    %656 = vmatprep.subr.mxu0 0.0
    %657 = vmatpush1.xpose.msra.mxu0 0.0
    %658 = vmatprep.subr.mxu0 0.0
    %659 = vmatpush1.xpose.msra.mxu0 0.0
    %660 = vmatprep.subr.mxu0 0.0
    %661 = vmatpush1.xpose.msra.mxu0 0.0
    %662 = vmatprep.subr.mxu0 0.0
    %663 = vmatpush1.xpose.msra.mxu0 0.0
    %664 = vmatprep.subr.mxu0 0.0
    %665 = vmatpush1.xpose.msra.mxu0 0.0
    %666 = vmatprep.subr.mxu0 0.0
    %667 = vmatpush1.xpose.msra.mxu0 0.0
    %668 = vmatprep.subr.mxu0 0.0
    %669 = vmatpush1.xpose.msra.mxu0 0.0
    %670 = vmatprep.subr.mxu0 0.0
    %671 = vmatpush1.xpose.msra.mxu0 0.0
    %672 = vmatprep.subr.mxu0 0.0
    %673 = vmatpush1.xpose.msra.mxu0 0.0
    %674 = vmatprep.mubr.f32.mxu0 0.0
    %675 = vmatmul.mubr.f32.gmra.mrb[0].mxu0 %v600
    %v676 = vpop.f32.mrb[0].mxu0
    %v677 = vadd.f32 %v392, %v676
    %v678 = vpop.f32.mrb[0].mxu0
    %679 = vdwg.mxu0
    %684 = vrot.lane.b32.xlu0 %v345, 96
    %v685 = vpop.permute.xlu0 %684
    %686 = vrot.lane.b32.xlu0 %v346, 96
    %v687 = vpop.permute.xlu0 %686
    %688 = vrot.lane.b32.xlu0 %v347, 96
    %v689 = vpop.permute.xlu0 %688
    %690 = vrot.lane.b32.xlu0 %v348, 96
    %v691 = vpop.permute.xlu0 %690
    %v693 = vsel %vm135, %v314, 0
    %v695 = vsel %vm135, %v685, 0
    %v697 = vsel %vm135, %v687, 0
    %v699 = vsel %vm135, %v689, 0
    %v701 = vsel %vm135, %v691, 0
    %703 = vmatprep.subr.mxu0 0.0
    %704 = vmatpush1.xpose.msra.mxu0 %v695
    %705 = vmatprep.subr.mxu0 0.0
    %706 = vmatpush1.xpose.msra.mxu0 %v697
    %707 = vmatprep.subr.mxu0 0.0
    %708 = vmatpush1.xpose.msra.mxu0 %v699
    %709 = vmatprep.subr.mxu0 0.0
    %710 = vmatpush1.xpose.msra.mxu0 %v701
    %711 = vmatprep.subr.mxu0 0.0
    %712 = vmatpush1.xpose.msra.mxu0 0.0
    %713 = vmatprep.subr.mxu0 0.0
    %714 = vmatpush1.xpose.msra.mxu0 0.0
    %715 = vmatprep.subr.mxu0 0.0
    %716 = vmatpush1.xpose.msra.mxu0 0.0
    %717 = vmatprep.subr.mxu0 0.0
    %718 = vmatpush1.xpose.msra.mxu0 0.0
    %719 = vmatprep.subr.mxu0 0.0
    %720 = vmatpush1.xpose.msra.mxu0 0.0
    %721 = vmatprep.subr.mxu0 0.0
    %722 = vmatpush1.xpose.msra.mxu0 0.0
    %723 = vmatprep.subr.mxu0 0.0
    %724 = vmatpush1.xpose.msra.mxu0 0.0
    %725 = vmatprep.subr.mxu0 0.0
    %726 = vmatpush1.xpose.msra.mxu0 0.0
    %727 = vmatprep.subr.mxu0 0.0
    %728 = vmatpush1.xpose.msra.mxu0 0.0
    %729 = vmatprep.subr.mxu0 0.0
    %730 = vmatpush1.xpose.msra.mxu0 0.0
    %731 = vmatprep.subr.mxu0 0.0
    %732 = vmatpush1.xpose.msra.mxu0 0.0
    %733 = vmatprep.subr.mxu0 0.0
    %734 = vmatpush1.xpose.msra.mxu0 0.0
    %735 = vmatprep.subr.mxu0 0.0
    %736 = vmatpush1.xpose.msra.mxu0 0.0
    %737 = vmatprep.subr.mxu0 0.0
    %738 = vmatpush1.xpose.msra.mxu0 0.0
    %739 = vmatprep.subr.mxu0 0.0
    %740 = vmatpush1.xpose.msra.mxu0 0.0
    %741 = vmatprep.subr.mxu0 0.0
    %742 = vmatpush1.xpose.msra.mxu0 0.0
    %743 = vmatprep.subr.mxu0 0.0
    %744 = vmatpush1.xpose.msra.mxu0 0.0
    %745 = vmatprep.subr.mxu0 0.0
    %746 = vmatpush1.xpose.msra.mxu0 0.0
    %747 = vmatprep.subr.mxu0 0.0
    %748 = vmatpush1.xpose.msra.mxu0 0.0
    %749 = vmatprep.subr.mxu0 0.0
    %750 = vmatpush1.xpose.msra.mxu0 0.0
    %751 = vmatprep.subr.mxu0 0.0
    %752 = vmatpush1.xpose.msra.mxu0 0.0
    %753 = vmatprep.subr.mxu0 0.0
    %754 = vmatpush1.xpose.msra.mxu0 0.0
    %755 = vmatprep.subr.mxu0 0.0
    %756 = vmatpush1.xpose.msra.mxu0 0.0
    %757 = vmatprep.subr.mxu0 0.0
    %758 = vmatpush1.xpose.msra.mxu0 0.0
    %759 = vmatprep.subr.mxu0 0.0
    %760 = vmatpush1.xpose.msra.mxu0 0.0
    %761 = vmatprep.subr.mxu0 0.0
    %762 = vmatpush1.xpose.msra.mxu0 0.0
    %763 = vmatprep.subr.mxu0 0.0
    %764 = vmatpush1.xpose.msra.mxu0 0.0
    %765 = vmatprep.subr.mxu0 0.0
    %766 = vmatpush1.xpose.msra.mxu0 0.0
    %767 = vmatprep.mubr.f32.mxu0 0.0
    %768 = vmatmul.mubr.f32.gmra.mrb[0].mxu0 %v693
    %v769 = vpop.f32.mrb[0].mxu0
    %v770 = vadd.f32 %v396, %v769
    %v771 = vpop.f32.mrb[0].mxu0
    %772 = vdwg.mxu0
    %v773 = vsel %vm135, %v491, -inf
    %774 = vmax.xlane.f32.xlu0 %v773
    %v775 = vpop.xlane.xlu0 %774
    %v776 = vsel %vm135, %v584, -inf
    %777 = vmax.xlane.f32.xlu0 %v776
    %v778 = vpop.xlane.xlu0 %777
    %v779 = vsel %vm135, %v677, -inf
    %780 = vmax.xlane.f32.xlu0 %v779
    %v781 = vpop.xlane.xlu0 %780
    %v782 = vsel %vm135, %v770, -inf
    %783 = vmax.xlane.f32.xlu0 %v782
    %v784 = vpop.xlane.xlu0 %783
    %v785 = vsub.f32 %v491, %v775
    %v786 = vsub.f32 %v584, %v778
    %v787 = vsub.f32 %v677, %v781
    %v788 = vsub.f32 %v770, %v784
    %v789 = vmul.f32 %v785, 1.442695
    %v790 = vpow.pop %v789
    %v791 = vmul.f32 %v786, 1.442695
    %v792 = vpow.pop %v791
    %v793 = vmul.f32 %v787, 1.442695
    %v794 = vpow.pop %v793
    %v795 = vmul.f32 %v788, 1.442695
    %v796 = vpow.pop %v795
    %v798 = vsel %vm135, %v790, 0
    %v801 = vsel %vm135, %v792, 0
    %v804 = vsel %vm135, %v794, 0
    %v807 = vsel %vm135, %v796, 0
    %809 = vmatprep.subr.mxu0 0.0
    %810 = vmatpush1.msra.mxu0 %v121
    %811 = vmatprep.subr.mxu0 0.0
    %812 = vmatpush1.msra.mxu0 %v122
    %813 = vmatprep.subr.mxu0 0.0
    %814 = vmatpush1.msra.mxu0 %v123
    %815 = vmatprep.subr.mxu0 0.0
    %816 = vmatpush1.msra.mxu0 %v124
    %817 = vmatprep.subr.mxu0 0.0
    %818 = vmatpush1.msra.mxu0 0.0
    %819 = vmatprep.subr.mxu0 0.0
    %820 = vmatpush1.msra.mxu0 0.0
    %821 = vmatprep.subr.mxu0 0.0
    %822 = vmatpush1.msra.mxu0 0.0
    %823 = vmatprep.subr.mxu0 0.0
    %824 = vmatpush1.msra.mxu0 0.0
    %825 = vmatprep.subr.mxu0 0.0
    %826 = vmatpush1.msra.mxu0 0.0
    %827 = vmatprep.subr.mxu0 0.0
    %828 = vmatpush1.msra.mxu0 0.0
    %829 = vmatprep.subr.mxu0 0.0
    %830 = vmatpush1.msra.mxu0 0.0
    %831 = vmatprep.subr.mxu0 0.0
    %832 = vmatpush1.msra.mxu0 0.0
    %833 = vmatprep.subr.mxu0 0.0
    %834 = vmatpush1.msra.mxu0 0.0
    %835 = vmatprep.subr.mxu0 0.0
    %836 = vmatpush1.msra.mxu0 0.0
    %837 = vmatprep.subr.mxu0 0.0
    %838 = vmatpush1.msra.mxu0 0.0
    %839 = vmatprep.subr.mxu0 0.0
    %840 = vmatpush1.msra.mxu0 0.0
    %841 = vmatprep.subr.mxu0 0.0
    %842 = vmatpush1.msra.mxu0 0.0
    %843 = vmatprep.subr.mxu0 0.0
    %844 = vmatpush1.msra.mxu0 0.0
    %845 = vmatprep.subr.mxu0 0.0
    %846 = vmatpush1.msra.mxu0 0.0
    %847 = vmatprep.subr.mxu0 0.0
    %848 = vmatpush1.msra.mxu0 0.0
    %849 = vmatprep.subr.mxu0 0.0
    %850 = vmatpush1.msra.mxu0 0.0
    %851 = vmatprep.subr.mxu0 0.0
    %852 = vmatpush1.msra.mxu0 0.0
    %853 = vmatprep.subr.mxu0 0.0
    %854 = vmatpush1.msra.mxu0 0.0
    %855 = vmatprep.subr.mxu0 0.0
    %856 = vmatpush1.msra.mxu0 0.0
    %857 = vmatprep.subr.mxu0 0.0
    %858 = vmatpush1.msra.mxu0 0.0
    %859 = vmatprep.subr.mxu0 0.0
    %860 = vmatpush1.msra.mxu0 0.0
    %861 = vmatprep.subr.mxu0 0.0
    %862 = vmatpush1.msra.mxu0 0.0
    %863 = vmatprep.subr.mxu0 0.0
    %864 = vmatpush1.msra.mxu0 0.0
    %865 = vmatprep.subr.mxu0 0.0
    %866 = vmatpush1.msra.mxu0 0.0
    %867 = vmatprep.subr.mxu0 0.0
    %868 = vmatpush1.msra.mxu0 0.0
    %869 = vmatprep.subr.mxu0 0.0
    %870 = vmatpush1.msra.mxu0 0.0
    %871 = vmatprep.subr.mxu0 0.0
    %872 = vmatpush1.msra.mxu0 0.0
    %873 = vmatprep.mubr.f32.mxu0 0.0
    %874 = vmatmul.mubr.f32.gmra.mrb[0].mxu0 %v798
    %v875 = vpop.f32.mrb[0].mxu0
    %v876 = vadd.f32 0.0, %v875
    %v877 = vpop.f32.mrb[0].mxu0
    %878 = vmatprep.mubr.f32.mxu0 0.0
    %879 = vmatmul.mubr.f32.gmra.mrb[0].mxu0 %v801
    %v880 = vpop.f32.mrb[0].mxu0
    %v881 = vadd.f32 0.0, %v880
    %v882 = vpop.f32.mrb[0].mxu0
    %883 = vmatprep.mubr.f32.mxu0 0.0
    %884 = vmatmul.mubr.f32.gmra.mrb[0].mxu0 %v804
    %v885 = vpop.f32.mrb[0].mxu0
    %v886 = vadd.f32 0.0, %v885
    %v887 = vpop.f32.mrb[0].mxu0
    %888 = vmatprep.mubr.f32.mxu0 0.0
    %889 = vmatmul.mubr.f32.gmra.mrb[0].mxu0 %v807
    %v890 = vpop.f32.mrb[0].mxu0
    %v891 = vadd.f32 0.0, %v890
    %v892 = vpop.f32.mrb[0].mxu0
    %893 = vdwg.mxu0
    %v894 = vrcp.pop %v876
    %v895 = vrcp.pop %v881
    %v896 = vrcp.pop %v886
    %v897 = vrcp.pop %v891
    %v898 = vmul.f32 %v790, %v894
    %v899 = vmul.f32 %v792, %v895
    %v900 = vmul.f32 %v794, %v896
    %v901 = vmul.f32 %v796, %v897
    %v906 = vlaneseq
    %v907 = vshrl.u32 %v906, 7
    %v908 = vsub.s32 0, %v907
    %v909 = vrot.slane %v113, %v908
    %v910 = vlaneseq
    %v911 = vshrl.u32 %v910, 7
    %v912 = vsub.s32 0, %v911
    %v913 = vrot.slane %v114, %v912
    %v914 = vlaneseq
    %v915 = vshrl.u32 %v914, 7
    %v916 = vsub.s32 0, %v915
    %v917 = vrot.slane %v115, %v916
    %v918 = vlaneseq
    %v919 = vshrl.u32 %v918, 7
    %v920 = vsub.s32 0, %v919
    %v921 = vrot.slane %v116, %v920
    %v926 = vmul.f32 %v898, %v909
    %v927 = vmul.f32 %v899, %v913
    %v928 = vmul.f32 %v900, %v917
    %v929 = vmul.f32 %v901, %v921
    %934 = vrot.lane.b32.xlu0 %v361, 64
    %v935 = vpop.permute.xlu0 %934
    %936 = vrot.lane.b32.xlu0 %v362, 64
    %v937 = vpop.permute.xlu0 %936
    %938 = vrot.lane.b32.xlu0 %v363, 64
    %v939 = vpop.permute.xlu0 %938
    %940 = vrot.lane.b32.xlu0 %v364, 64
    %v941 = vpop.permute.xlu0 %940
    %v947 = vsel %vm135, %v926, 0
    %949 = vmatprep.subr.mxu0 0.0
    %950 = vmatpush1.msra.mxu0 %v935
    %951 = vmatprep.subr.mxu0 0.0
    %952 = vmatpush1.msra.mxu0 %v937
    %953 = vmatprep.subr.mxu0 0.0
    %954 = vmatpush1.msra.mxu0 %v939
    %955 = vmatprep.subr.mxu0 0.0
    %956 = vmatpush1.msra.mxu0 %v941
    %957 = vmatprep.subr.mxu0 0.0
    %958 = vmatpush1.msra.mxu0 0.0
    %959 = vmatprep.subr.mxu0 0.0
    %960 = vmatpush1.msra.mxu0 0.0
    %961 = vmatprep.subr.mxu0 0.0
    %962 = vmatpush1.msra.mxu0 0.0
    %963 = vmatprep.subr.mxu0 0.0
    %964 = vmatpush1.msra.mxu0 0.0
    %965 = vmatprep.subr.mxu0 0.0
    %966 = vmatpush1.msra.mxu0 0.0
    %967 = vmatprep.subr.mxu0 0.0
    %968 = vmatpush1.msra.mxu0 0.0
    %969 = vmatprep.subr.mxu0 0.0
    %970 = vmatpush1.msra.mxu0 0.0
    %971 = vmatprep.subr.mxu0 0.0
    %972 = vmatpush1.msra.mxu0 0.0
    %973 = vmatprep.subr.mxu0 0.0
    %974 = vmatpush1.msra.mxu0 0.0
    %975 = vmatprep.subr.mxu0 0.0
    %976 = vmatpush1.msra.mxu0 0.0
    %977 = vmatprep.subr.mxu0 0.0
    %978 = vmatpush1.msra.mxu0 0.0
    %979 = vmatprep.subr.mxu0 0.0
    %980 = vmatpush1.msra.mxu0 0.0
    %981 = vmatprep.subr.mxu0 0.0
    %982 = vmatpush1.msra.mxu0 0.0
    %983 = vmatprep.subr.mxu0 0.0
    %984 = vmatpush1.msra.mxu0 0.0
    %985 = vmatprep.subr.mxu0 0.0
    %986 = vmatpush1.msra.mxu0 0.0
    %987 = vmatprep.subr.mxu0 0.0
    %988 = vmatpush1.msra.mxu0 0.0
    %989 = vmatprep.subr.mxu0 0.0
    %990 = vmatpush1.msra.mxu0 0.0
    %991 = vmatprep.subr.mxu0 0.0
    %992 = vmatpush1.msra.mxu0 0.0
    %993 = vmatprep.subr.mxu0 0.0
    %994 = vmatpush1.msra.mxu0 0.0
    %995 = vmatprep.subr.mxu0 0.0
    %996 = vmatpush1.msra.mxu0 0.0
    %997 = vmatprep.subr.mxu0 0.0
    %998 = vmatpush1.msra.mxu0 0.0
    %999 = vmatprep.subr.mxu0 0.0
    %1000 = vmatpush1.msra.mxu0 0.0
    %1001 = vmatprep.subr.mxu0 0.0
    %1002 = vmatpush1.msra.mxu0 0.0
    %1003 = vmatprep.subr.mxu0 0.0
    %1004 = vmatpush1.msra.mxu0 0.0
    %1005 = vmatprep.subr.mxu0 0.0
    %1006 = vmatpush1.msra.mxu0 0.0
    %1007 = vmatprep.subr.mxu0 0.0
    %1008 = vmatpush1.msra.mxu0 0.0
    %1009 = vmatprep.subr.mxu0 0.0
    %1010 = vmatpush1.msra.mxu0 0.0
    %1011 = vmatprep.subr.mxu0 0.0
    %1012 = vmatpush1.msra.mxu0 0.0
    %1013 = vmatprep.mubr.f32.mxu0 0.0
    %1014 = vmatmul.mubr.f32.gmra.mrb[0].mxu0 %v947
    %v1015 = vpop.f32.mrb[0].mxu0
    %v1016 = vadd.f32 0.0, %v1015
    %v1017 = vpop.f32.mrb[0].mxu0
    %1018 = vdwg.mxu0
    %1023 = vrot.lane.b32.xlu0 %v365, 64
    %v1024 = vpop.permute.xlu0 %1023
    %1025 = vrot.lane.b32.xlu0 %v366, 64
    %v1026 = vpop.permute.xlu0 %1025
    %1027 = vrot.lane.b32.xlu0 %v367, 64
    %v1028 = vpop.permute.xlu0 %1027
    %1029 = vrot.lane.b32.xlu0 %v368, 64
    %v1030 = vpop.permute.xlu0 %1029
    %v1036 = vsel %vm135, %v927, 0
    %1038 = vmatprep.subr.mxu0 0.0
    %1039 = vmatpush1.msra.mxu0 %v1024
    %1040 = vmatprep.subr.mxu0 0.0
    %1041 = vmatpush1.msra.mxu0 %v1026
    %1042 = vmatprep.subr.mxu0 0.0
    %1043 = vmatpush1.msra.mxu0 %v1028
    %1044 = vmatprep.subr.mxu0 0.0
    %1045 = vmatpush1.msra.mxu0 %v1030
    %1046 = vmatprep.subr.mxu0 0.0
    %1047 = vmatpush1.msra.mxu0 0.0
    %1048 = vmatprep.subr.mxu0 0.0
    %1049 = vmatpush1.msra.mxu0 0.0
    %1050 = vmatprep.subr.mxu0 0.0
    %1051 = vmatpush1.msra.mxu0 0.0
    %1052 = vmatprep.subr.mxu0 0.0
    %1053 = vmatpush1.msra.mxu0 0.0
    %1054 = vmatprep.subr.mxu0 0.0
    %1055 = vmatpush1.msra.mxu0 0.0
    %1056 = vmatprep.subr.mxu0 0.0
    %1057 = vmatpush1.msra.mxu0 0.0
    %1058 = vmatprep.subr.mxu0 0.0
    %1059 = vmatpush1.msra.mxu0 0.0
    %1060 = vmatprep.subr.mxu0 0.0
    %1061 = vmatpush1.msra.mxu0 0.0
    %1062 = vmatprep.subr.mxu0 0.0
    %1063 = vmatpush1.msra.mxu0 0.0
    %1064 = vmatprep.subr.mxu0 0.0
    %1065 = vmatpush1.msra.mxu0 0.0
    %1066 = vmatprep.subr.mxu0 0.0
    %1067 = vmatpush1.msra.mxu0 0.0
    %1068 = vmatprep.subr.mxu0 0.0
    %1069 = vmatpush1.msra.mxu0 0.0
    %1070 = vmatprep.subr.mxu0 0.0
    %1071 = vmatpush1.msra.mxu0 0.0
    %1072 = vmatprep.subr.mxu0 0.0
    %1073 = vmatpush1.msra.mxu0 0.0
    %1074 = vmatprep.subr.mxu0 0.0
    %1075 = vmatpush1.msra.mxu0 0.0
    %1076 = vmatprep.subr.mxu0 0.0
    %1077 = vmatpush1.msra.mxu0 0.0
    %1078 = vmatprep.subr.mxu0 0.0
    %1079 = vmatpush1.msra.mxu0 0.0
    %1080 = vmatprep.subr.mxu0 0.0
    %1081 = vmatpush1.msra.mxu0 0.0
    %1082 = vmatprep.subr.mxu0 0.0
    %1083 = vmatpush1.msra.mxu0 0.0
    %1084 = vmatprep.subr.mxu0 0.0
    %1085 = vmatpush1.msra.mxu0 0.0
    %1086 = vmatprep.subr.mxu0 0.0
    %1087 = vmatpush1.msra.mxu0 0.0
    %1088 = vmatprep.subr.mxu0 0.0
    %1089 = vmatpush1.msra.mxu0 0.0
    %1090 = vmatprep.subr.mxu0 0.0
    %1091 = vmatpush1.msra.mxu0 0.0
    %1092 = vmatprep.subr.mxu0 0.0
    %1093 = vmatpush1.msra.mxu0 0.0
    %1094 = vmatprep.subr.mxu0 0.0
    %1095 = vmatpush1.msra.mxu0 0.0
    %1096 = vmatprep.subr.mxu0 0.0
    %1097 = vmatpush1.msra.mxu0 0.0
    %1098 = vmatprep.subr.mxu0 0.0
    %1099 = vmatpush1.msra.mxu0 0.0
    %1100 = vmatprep.subr.mxu0 0.0
    %1101 = vmatpush1.msra.mxu0 0.0
    %1102 = vmatprep.mubr.f32.mxu0 0.0
    %1103 = vmatmul.mubr.f32.gmra.mrb[0].mxu0 %v1036
    %v1104 = vpop.f32.mrb[0].mxu0
    %v1105 = vadd.f32 0.0, %v1104
    %v1106 = vpop.f32.mrb[0].mxu0
    %1107 = vdwg.mxu0
    %1112 = vrot.lane.b32.xlu0 %v369, 64
    %v1113 = vpop.permute.xlu0 %1112
    %1114 = vrot.lane.b32.xlu0 %v370, 64
    %v1115 = vpop.permute.xlu0 %1114
    %1116 = vrot.lane.b32.xlu0 %v371, 64
    %v1117 = vpop.permute.xlu0 %1116
    %1118 = vrot.lane.b32.xlu0 %v372, 64
    %v1119 = vpop.permute.xlu0 %1118
    %v1125 = vsel %vm135, %v928, 0
    %1127 = vmatprep.subr.mxu0 0.0
    %1128 = vmatpush1.msra.mxu0 %v1113
    %1129 = vmatprep.subr.mxu0 0.0
    %1130 = vmatpush1.msra.mxu0 %v1115
    %1131 = vmatprep.subr.mxu0 0.0
    %1132 = vmatpush1.msra.mxu0 %v1117
    %1133 = vmatprep.subr.mxu0 0.0
    %1134 = vmatpush1.msra.mxu0 %v1119
    %1135 = vmatprep.subr.mxu0 0.0
    %1136 = vmatpush1.msra.mxu0 0.0
    %1137 = vmatprep.subr.mxu0 0.0
    %1138 = vmatpush1.msra.mxu0 0.0
    %1139 = vmatprep.subr.mxu0 0.0
    %1140 = vmatpush1.msra.mxu0 0.0
    %1141 = vmatprep.subr.mxu0 0.0
    %1142 = vmatpush1.msra.mxu0 0.0
    %1143 = vmatprep.subr.mxu0 0.0
    %1144 = vmatpush1.msra.mxu0 0.0
    %1145 = vmatprep.subr.mxu0 0.0
    %1146 = vmatpush1.msra.mxu0 0.0
    %1147 = vmatprep.subr.mxu0 0.0
    %1148 = vmatpush1.msra.mxu0 0.0
    %1149 = vmatprep.subr.mxu0 0.0
    %1150 = vmatpush1.msra.mxu0 0.0
    %1151 = vmatprep.subr.mxu0 0.0
    %1152 = vmatpush1.msra.mxu0 0.0
    %1153 = vmatprep.subr.mxu0 0.0
    %1154 = vmatpush1.msra.mxu0 0.0
    %1155 = vmatprep.subr.mxu0 0.0
    %1156 = vmatpush1.msra.mxu0 0.0
    %1157 = vmatprep.subr.mxu0 0.0
    %1158 = vmatpush1.msra.mxu0 0.0
    %1159 = vmatprep.subr.mxu0 0.0
    %1160 = vmatpush1.msra.mxu0 0.0
    %1161 = vmatprep.subr.mxu0 0.0
    %1162 = vmatpush1.msra.mxu0 0.0
    %1163 = vmatprep.subr.mxu0 0.0
    %1164 = vmatpush1.msra.mxu0 0.0
    %1165 = vmatprep.subr.mxu0 0.0
    %1166 = vmatpush1.msra.mxu0 0.0
    %1167 = vmatprep.subr.mxu0 0.0
    %1168 = vmatpush1.msra.mxu0 0.0
    %1169 = vmatprep.subr.mxu0 0.0
    %1170 = vmatpush1.msra.mxu0 0.0
    %1171 = vmatprep.subr.mxu0 0.0
    %1172 = vmatpush1.msra.mxu0 0.0
    %1173 = vmatprep.subr.mxu0 0.0
    %1174 = vmatpush1.msra.mxu0 0.0
    %1175 = vmatprep.subr.mxu0 0.0
    %1176 = vmatpush1.msra.mxu0 0.0
    %1177 = vmatprep.subr.mxu0 0.0
    %1178 = vmatpush1.msra.mxu0 0.0
    %1179 = vmatprep.subr.mxu0 0.0
    %1180 = vmatpush1.msra.mxu0 0.0
    %1181 = vmatprep.subr.mxu0 0.0
    %1182 = vmatpush1.msra.mxu0 0.0
    %1183 = vmatprep.subr.mxu0 0.0
    %1184 = vmatpush1.msra.mxu0 0.0
    %1185 = vmatprep.subr.mxu0 0.0
    %1186 = vmatpush1.msra.mxu0 0.0
    %1187 = vmatprep.subr.mxu0 0.0
    %1188 = vmatpush1.msra.mxu0 0.0
    %1189 = vmatprep.subr.mxu0 0.0
    %1190 = vmatpush1.msra.mxu0 0.0
    %1191 = vmatprep.mubr.f32.mxu0 0.0
    %1192 = vmatmul.mubr.f32.gmra.mrb[0].mxu0 %v1125
    %v1193 = vpop.f32.mrb[0].mxu0
    %v1194 = vadd.f32 0.0, %v1193
    %v1195 = vpop.f32.mrb[0].mxu0
    %1196 = vdwg.mxu0
    %1201 = vrot.lane.b32.xlu0 %v373, 64
    %v1202 = vpop.permute.xlu0 %1201
    %1203 = vrot.lane.b32.xlu0 %v374, 64
    %v1204 = vpop.permute.xlu0 %1203
    %1205 = vrot.lane.b32.xlu0 %v375, 64
    %v1206 = vpop.permute.xlu0 %1205
    %1207 = vrot.lane.b32.xlu0 %v376, 64
    %v1208 = vpop.permute.xlu0 %1207
    %v1214 = vsel %vm135, %v929, 0
    %1216 = vmatprep.subr.mxu0 0.0
    %1217 = vmatpush1.msra.mxu0 %v1202
    %1218 = vmatprep.subr.mxu0 0.0
    %1219 = vmatpush1.msra.mxu0 %v1204
    %1220 = vmatprep.subr.mxu0 0.0
    %1221 = vmatpush1.msra.mxu0 %v1206
    %1222 = vmatprep.subr.mxu0 0.0
    %1223 = vmatpush1.msra.mxu0 %v1208
    %1224 = vmatprep.subr.mxu0 0.0
    %1225 = vmatpush1.msra.mxu0 0.0
    %1226 = vmatprep.subr.mxu0 0.0
    %1227 = vmatpush1.msra.mxu0 0.0
    %1228 = vmatprep.subr.mxu0 0.0
    %1229 = vmatpush1.msra.mxu0 0.0
    %1230 = vmatprep.subr.mxu0 0.0
    %1231 = vmatpush1.msra.mxu0 0.0
    %1232 = vmatprep.subr.mxu0 0.0
    %1233 = vmatpush1.msra.mxu0 0.0
    %1234 = vmatprep.subr.mxu0 0.0
    %1235 = vmatpush1.msra.mxu0 0.0
    %1236 = vmatprep.subr.mxu0 0.0
    %1237 = vmatpush1.msra.mxu0 0.0
    %1238 = vmatprep.subr.mxu0 0.0
    %1239 = vmatpush1.msra.mxu0 0.0
    %1240 = vmatprep.subr.mxu0 0.0
    %1241 = vmatpush1.msra.mxu0 0.0
    %1242 = vmatprep.subr.mxu0 0.0
    %1243 = vmatpush1.msra.mxu0 0.0
    %1244 = vmatprep.subr.mxu0 0.0
    %1245 = vmatpush1.msra.mxu0 0.0
    %1246 = vmatprep.subr.mxu0 0.0
    %1247 = vmatpush1.msra.mxu0 0.0
    %1248 = vmatprep.subr.mxu0 0.0
    %1249 = vmatpush1.msra.mxu0 0.0
    %1250 = vmatprep.subr.mxu0 0.0
    %1251 = vmatpush1.msra.mxu0 0.0
    %1252 = vmatprep.subr.mxu0 0.0
    %1253 = vmatpush1.msra.mxu0 0.0
    %1254 = vmatprep.subr.mxu0 0.0
    %1255 = vmatpush1.msra.mxu0 0.0
    %1256 = vmatprep.subr.mxu0 0.0
    %1257 = vmatpush1.msra.mxu0 0.0
    %1258 = vmatprep.subr.mxu0 0.0
    %1259 = vmatpush1.msra.mxu0 0.0
    %1260 = vmatprep.subr.mxu0 0.0
    %1261 = vmatpush1.msra.mxu0 0.0
    %1262 = vmatprep.subr.mxu0 0.0
    %1263 = vmatpush1.msra.mxu0 0.0
    %1264 = vmatprep.subr.mxu0 0.0
    %1265 = vmatpush1.msra.mxu0 0.0
    %1266 = vmatprep.subr.mxu0 0.0
    %1267 = vmatpush1.msra.mxu0 0.0
    %1268 = vmatprep.subr.mxu0 0.0
    %1269 = vmatpush1.msra.mxu0 0.0
    %1270 = vmatprep.subr.mxu0 0.0
    %1271 = vmatpush1.msra.mxu0 0.0
    %1272 = vmatprep.subr.mxu0 0.0
    %1273 = vmatpush1.msra.mxu0 0.0
    %1274 = vmatprep.subr.mxu0 0.0
    %1275 = vmatpush1.msra.mxu0 0.0
    %1276 = vmatprep.subr.mxu0 0.0
    %1277 = vmatpush1.msra.mxu0 0.0
    %1278 = vmatprep.subr.mxu0 0.0
    %1279 = vmatpush1.msra.mxu0 0.0
    %1280 = vmatprep.mubr.f32.mxu0 0.0
    %1281 = vmatmul.mubr.f32.gmra.mrb[0].mxu0 %v1214
    %v1282 = vpop.f32.mrb[0].mxu0
    %v1283 = vadd.f32 0.0, %v1282
    %v1284 = vpop.f32.mrb[0].mxu0
    %1285 = vdwg.mxu0
    %v1286 = vld [vmem:[#allocation7] sm:$0xff]
    %v1287 = vld [vmem:[#allocation7 + $0x8] sm:$0xff]
    %v1288 = vld [vmem:[#allocation7 + $0x10] sm:$0xff]
    %v1289 = vld [vmem:[#allocation7 + $0x18] sm:$0xff]
    %v1290 = vld [vmem:[%s9] sm:$0x1]
    %v1292 = vlaneseq
    %v1293 = vshrl.u32 %v1292, 7
    %v1294 = vsub.s32 0, %v1293
    %v1295 = vrot.slane %v1290, %v1294
    %v1298 = vsel %vm135, %v1016, 0
    %v1301 = vsel %vm135, %v1105, 0
    %v1304 = vsel %vm135, %v1194, 0
    %v1307 = vsel %vm135, %v1283, 0
    %1309 = vmatprep.subr.mxu0 0.0
    %1310 = vmatpush1.msra.mxu0 %v1286
    %1311 = vmatprep.subr.mxu0 0.0
    %1312 = vmatpush1.msra.mxu0 %v1287
    %1313 = vmatprep.subr.mxu0 0.0
    %1314 = vmatpush1.msra.mxu0 %v1288
    %1315 = vmatprep.subr.mxu0 0.0
    %1316 = vmatpush1.msra.mxu0 %v1289
    %1317 = vmatprep.subr.mxu0 0.0
    %1318 = vmatpush1.msra.mxu0 0.0
    %1319 = vmatprep.subr.mxu0 0.0
    %1320 = vmatpush1.msra.mxu0 0.0
    %1321 = vmatprep.subr.mxu0 0.0
    %1322 = vmatpush1.msra.mxu0 0.0
    %1323 = vmatprep.subr.mxu0 0.0
    %1324 = vmatpush1.msra.mxu0 0.0
    %1325 = vmatprep.subr.mxu0 0.0
    %1326 = vmatpush1.msra.mxu0 0.0
    %1327 = vmatprep.subr.mxu0 0.0
    %1328 = vmatpush1.msra.mxu0 0.0
    %1329 = vmatprep.subr.mxu0 0.0
    %1330 = vmatpush1.msra.mxu0 0.0
    %1331 = vmatprep.subr.mxu0 0.0
    %1332 = vmatpush1.msra.mxu0 0.0
    %1333 = vmatprep.subr.mxu0 0.0
    %1334 = vmatpush1.msra.mxu0 0.0
    %1335 = vmatprep.subr.mxu0 0.0
    %1336 = vmatpush1.msra.mxu0 0.0
    %1337 = vmatprep.subr.mxu0 0.0
    %1338 = vmatpush1.msra.mxu0 0.0
    %1339 = vmatprep.subr.mxu0 0.0
    %1340 = vmatpush1.msra.mxu0 0.0
    %1341 = vmatprep.subr.mxu0 0.0
    %1342 = vmatpush1.msra.mxu0 0.0
    %1343 = vmatprep.subr.mxu0 0.0
    %1344 = vmatpush1.msra.mxu0 0.0
    %1345 = vmatprep.subr.mxu0 0.0
    %1346 = vmatpush1.msra.mxu0 0.0
    %1347 = vmatprep.subr.mxu0 0.0
    %1348 = vmatpush1.msra.mxu0 0.0
    %1349 = vmatprep.subr.mxu0 0.0
    %1350 = vmatpush1.msra.mxu0 0.0
    %1351 = vmatprep.subr.mxu0 0.0
    %1352 = vmatpush1.msra.mxu0 0.0
    %1353 = vmatprep.subr.mxu0 0.0
    %1354 = vmatpush1.msra.mxu0 0.0
    %1355 = vmatprep.subr.mxu0 0.0
    %1356 = vmatpush1.msra.mxu0 0.0
    %1357 = vmatprep.subr.mxu0 0.0
    %1358 = vmatpush1.msra.mxu0 0.0
    %1359 = vmatprep.subr.mxu0 0.0
    %1360 = vmatpush1.msra.mxu0 0.0
    %1361 = vmatprep.subr.mxu0 0.0
    %1362 = vmatpush1.msra.mxu0 0.0
    %1363 = vmatprep.subr.mxu0 0.0
    %1364 = vmatpush1.msra.mxu0 0.0
    %1365 = vmatprep.subr.mxu0 0.0
    %1366 = vmatpush1.msra.mxu0 0.0
    %1367 = vmatprep.subr.mxu0 0.0
    %1368 = vmatpush1.msra.mxu0 0.0
    %1369 = vmatprep.subr.mxu0 0.0
    %1370 = vmatpush1.msra.mxu0 0.0
    %1371 = vmatprep.subr.mxu0 0.0
    %1372 = vmatpush1.msra.mxu0 0.0
    %1373 = vmatprep.mubr.f32.mxu0 0.0
    %1374 = vmatmul.mubr.f32.gmra.mrb[0].mxu0 %v1298
    %v1375 = vpop.f32.mrb[0].mxu0
    %v1376 = vadd.f32 %v1295, %v1375
    %v1377 = vpop.f32.mrb[0].mxu0
    %1378 = vmatprep.mubr.f32.mxu0 0.0
    %1379 = vmatmul.mubr.f32.gmra.mrb[0].mxu0 %v1301
    %v1380 = vpop.f32.mrb[0].mxu0
    %v1381 = vadd.f32 %v1295, %v1380
    %v1382 = vpop.f32.mrb[0].mxu0
    %1383 = vmatprep.mubr.f32.mxu0 0.0
    %1384 = vmatmul.mubr.f32.gmra.mrb[0].mxu0 %v1304
    %v1385 = vpop.f32.mrb[0].mxu0
    %v1386 = vadd.f32 %v1295, %v1385
    %v1387 = vpop.f32.mrb[0].mxu0
    %1388 = vmatprep.mubr.f32.mxu0 0.0
    %1389 = vmatmul.mubr.f32.gmra.mrb[0].mxu0 %v1307
    %v1390 = vpop.f32.mrb[0].mxu0
    %v1391 = vadd.f32 %v1295, %v1390
    %v1392 = vpop.f32.mrb[0].mxu0
    %1393 = vdwg.mxu0
    %v1394 = vadd.f32 %v109, %v1376
    %v1395 = vadd.f32 %v110, %v1381
    %v1396 = vadd.f32 %v111, %v1386
    %v1397 = vadd.f32 %v112, %v1391
    %v1398 = vld [vmem:[%s10] sm:$0x1]
    %v1399 = vld [vmem:[%s11] sm:$0x1]
    %v1400 = vsel %vm135, %v1394, 0.0
    %1401 = vadd.xlane.f32.xlu0 %v1400
    %v1402 = vpop.xlane.xlu0 %1401
    %v1403 = vsel %vm135, %v1395, 0.0
    %1404 = vadd.xlane.f32.xlu0 %v1403
    %v1405 = vpop.xlane.xlu0 %1404
    %v1406 = vsel %vm135, %v1396, 0.0
    %1407 = vadd.xlane.f32.xlu0 %v1406
    %v1408 = vpop.xlane.xlu0 %1407
    %v1409 = vsel %vm135, %v1397, 0.0
    %1410 = vadd.xlane.f32.xlu0 %v1409
    %v1411 = vpop.xlane.xlu0 %1410
    %v1412 = vmul.f32 %v1402, %v148
    %v1413 = vmul.f32 %v1405, %v148
    %v1414 = vmul.f32 %v1408, %v148
    %v1415 = vmul.f32 %v1411, %v148
    %v1416 = vsub.f32 %v1394, %v1412
    %v1417 = vsub.f32 %v1395, %v1413
    %v1418 = vsub.f32 %v1396, %v1414
    %v1419 = vsub.f32 %v1397, %v1415
    %v1420 = vmul.f32 %v1416, %v1416
    %v1421 = vmul.f32 %v1417, %v1417
    %v1422 = vmul.f32 %v1418, %v1418
    %v1423 = vmul.f32 %v1419, %v1419
    %v1424 = vsel %vm135, %v1420, 0.0
    %1425 = vadd.xlane.f32.xlu0 %v1424
    %v1426 = vpop.xlane.xlu0 %1425
    %v1427 = vsel %vm135, %v1421, 0.0
    %1428 = vadd.xlane.f32.xlu0 %v1427
    %v1429 = vpop.xlane.xlu0 %1428
    %v1430 = vsel %vm135, %v1422, 0.0
    %1431 = vadd.xlane.f32.xlu0 %v1430
    %v1432 = vpop.xlane.xlu0 %1431
    %v1433 = vsel %vm135, %v1423, 0.0
    %1434 = vadd.xlane.f32.xlu0 %v1433
    %v1435 = vpop.xlane.xlu0 %1434
    %v1436 = vmul.f32 %v1426, %v148
    %v1437 = vmul.f32 %v1429, %v148
    %v1438 = vmul.f32 %v1432, %v148
    %v1439 = vmul.f32 %v1435, %v148
    %v1440 = vadd.f32 %v1436, 1e-05
    %v1441 = vadd.f32 %v1437, 1e-05
    %v1442 = vadd.f32 %v1438, 1e-05
    %v1443 = vadd.f32 %v1439, 1e-05
    %v1444 = vrsqrt.pop %v1440
    %v1445 = vrsqrt.pop %v1441
    %v1446 = vrsqrt.pop %v1442
    %v1447 = vrsqrt.pop %v1443
    %v1448 = vmul.f32 %v1416, %v1444
    %v1449 = vmul.f32 %v1417, %v1445
    %v1450 = vmul.f32 %v1418, %v1446
    %v1451 = vmul.f32 %v1419, %v1447
    %v1453 = vlaneseq
    %v1454 = vshrl.u32 %v1453, 7
    %v1455 = vsub.s32 0, %v1454
    %v1456 = vrot.slane %v1398, %v1455
    %v1458 = vmul.f32 %v1448, %v1456
    %v1459 = vmul.f32 %v1449, %v1456
    %v1460 = vmul.f32 %v1450, %v1456
    %v1461 = vmul.f32 %v1451, %v1456
    %v1463 = vlaneseq
    %v1464 = vshrl.u32 %v1463, 7
    %v1465 = vsub.s32 0, %v1464
    %v1466 = vrot.slane %v1399, %v1465
    %v1468 = vadd.f32 %v1458, %v1466
    %v1469 = vadd.f32 %v1459, %v1466
    %v1470 = vadd.f32 %v1460, %v1466
    %v1471 = vadd.f32 %v1461, %v1466
    %v1472 = vld [vmem:[#allocation8] sm:$0xff]
    %v1473 = vld [vmem:[#allocation8 + $0x8] sm:$0xff]
    %v1474 = vld [vmem:[#allocation8 + $0x10] sm:$0xff]
    %v1475 = vld [vmem:[#allocation8 + $0x18] sm:$0xff]
    %v1476 = vld [vmem:[%s13] sm:$0x1]
    %v1478 = vlaneseq
    %v1479 = vshrl.u32 %v1478, 7
    %v1480 = vsub.s32 0, %v1479
    %v1481 = vrot.slane %v1476, %v1480
    %v1484 = vsel %vm135, %v1468, 0
    %v1487 = vsel %vm135, %v1469, 0
    %v1490 = vsel %vm135, %v1470, 0
    %v1493 = vsel %vm135, %v1471, 0
    %1495 = vmatprep.subr.mxu0 0.0
    %1496 = vmatpush1.msra.mxu0 %v1472
    %1497 = vmatprep.subr.mxu0 0.0
    %1498 = vmatpush1.msra.mxu0 %v1473
    %1499 = vmatprep.subr.mxu0 0.0
    %1500 = vmatpush1.msra.mxu0 %v1474
    %1501 = vmatprep.subr.mxu0 0.0
    %1502 = vmatpush1.msra.mxu0 %v1475
    %1503 = vmatprep.subr.mxu0 0.0
    %1504 = vmatpush1.msra.mxu0 0.0
    %1505 = vmatprep.subr.mxu0 0.0
    %1506 = vmatpush1.msra.mxu0 0.0
    %1507 = vmatprep.subr.mxu0 0.0
    %1508 = vmatpush1.msra.mxu0 0.0
    %1509 = vmatprep.subr.mxu0 0.0
    %1510 = vmatpush1.msra.mxu0 0.0
    %1511 = vmatprep.subr.mxu0 0.0
    %1512 = vmatpush1.msra.mxu0 0.0
    %1513 = vmatprep.subr.mxu0 0.0
    %1514 = vmatpush1.msra.mxu0 0.0
    %1515 = vmatprep.subr.mxu0 0.0
    %1516 = vmatpush1.msra.mxu0 0.0
    %1517 = vmatprep.subr.mxu0 0.0
    %1518 = vmatpush1.msra.mxu0 0.0
    %1519 = vmatprep.subr.mxu0 0.0
    %1520 = vmatpush1.msra.mxu0 0.0
    %1521 = vmatprep.subr.mxu0 0.0
    %1522 = vmatpush1.msra.mxu0 0.0
    %1523 = vmatprep.subr.mxu0 0.0
    %1524 = vmatpush1.msra.mxu0 0.0
    %1525 = vmatprep.subr.mxu0 0.0
    %1526 = vmatpush1.msra.mxu0 0.0
    %1527 = vmatprep.subr.mxu0 0.0
    %1528 = vmatpush1.msra.mxu0 0.0
    %1529 = vmatprep.subr.mxu0 0.0
    %1530 = vmatpush1.msra.mxu0 0.0
    %1531 = vmatprep.subr.mxu0 0.0
    %1532 = vmatpush1.msra.mxu0 0.0
    %1533 = vmatprep.subr.mxu0 0.0
    %1534 = vmatpush1.msra.mxu0 0.0
    %1535 = vmatprep.subr.mxu0 0.0
    %1536 = vmatpush1.msra.mxu0 0.0
    %1537 = vmatprep.subr.mxu0 0.0
    %1538 = vmatpush1.msra.mxu0 0.0
    %1539 = vmatprep.subr.mxu0 0.0
    %1540 = vmatpush1.msra.mxu0 0.0
    %1541 = vmatprep.subr.mxu0 0.0
    %1542 = vmatpush1.msra.mxu0 0.0
    %1543 = vmatprep.subr.mxu0 0.0
    %1544 = vmatpush1.msra.mxu0 0.0
    %1545 = vmatprep.subr.mxu0 0.0
    %1546 = vmatpush1.msra.mxu0 0.0
    %1547 = vmatprep.subr.mxu0 0.0
    %1548 = vmatpush1.msra.mxu0 0.0
    %1549 = vmatprep.subr.mxu0 0.0
    %1550 = vmatpush1.msra.mxu0 0.0
    %1551 = vmatprep.subr.mxu0 0.0
    %1552 = vmatpush1.msra.mxu0 0.0
    %1553 = vmatprep.subr.mxu0 0.0
    %1554 = vmatpush1.msra.mxu0 0.0
    %1555 = vmatprep.subr.mxu0 0.0
    %1556 = vmatpush1.msra.mxu0 0.0
    %1557 = vmatprep.subr.mxu0 0.0
    %1558 = vmatpush1.msra.mxu0 0.0
    %1559 = vmatprep.mubr.f32.mxu0 0.0
    %1560 = vmatmul.mubr.f32.gmra.mrb[0].mxu0 %v1484
    %v1561 = vpop.f32.mrb[0].mxu0
    %v1562 = vadd.f32 %v1481, %v1561
    %v1563 = vpop.f32.mrb[0].mxu0
    %1564 = vmatprep.mubr.f32.mxu0 0.0
    %1565 = vmatmul.mubr.f32.gmra.mrb[0].mxu0 %v1487
    %v1566 = vpop.f32.mrb[0].mxu0
    %v1567 = vadd.f32 %v1481, %v1566
    %v1568 = vpop.f32.mrb[0].mxu0
    %1569 = vmatprep.mubr.f32.mxu0 0.0
    %1570 = vmatmul.mubr.f32.gmra.mrb[0].mxu0 %v1490
    %v1571 = vpop.f32.mrb[0].mxu0
    %v1572 = vadd.f32 %v1481, %v1571
    %v1573 = vpop.f32.mrb[0].mxu0
    %1574 = vmatprep.mubr.f32.mxu0 0.0
    %1575 = vmatmul.mubr.f32.gmra.mrb[0].mxu0 %v1493
    %v1576 = vpop.f32.mrb[0].mxu0
    %v1577 = vadd.f32 %v1481, %v1576
    %v1578 = vpop.f32.mrb[0].mxu0
    %1579 = vdwg.mxu0
    %v1580 = vmax.f32 %v1562, 0.0
    %v1581 = vmax.f32 %v1567, 0.0
    %v1582 = vmax.f32 %v1572, 0.0
    %v1583 = vmax.f32 %v1577, 0.0
    %v1584 = vld [vmem:[%s14] sm:$0xff]
    %v1585 = vld [vmem:[%s14 + $0x8] sm:$0xff]
    %v1586 = vld [vmem:[%s14 + $0x10] sm:$0xff]
    %v1587 = vld [vmem:[%s14 + $0x18] sm:$0xff]
    %v1588 = vld [vmem:[%s14 + $0x20] sm:$0xff]
    %v1589 = vld [vmem:[%s14 + $0x28] sm:$0xff]
    %v1590 = vld [vmem:[%s14 + $0x30] sm:$0xff]
    %v1591 = vld [vmem:[%s14 + $0x38] sm:$0xff]
    %vm1592 = vcmask 523264
    %v1594 = vsel %vm1592, %v1580, 0
    %v1597 = vsel %vm1592, %v1581, 0
    %v1600 = vsel %vm1592, %v1582, 0
    %v1603 = vsel %vm1592, %v1583, 0
    %1605 = vmatprep.subr.mxu0 0.0
    %1606 = vmatpush1.msra.mxu0 %v1584
    %1607 = vmatprep.subr.mxu0 0.0
    %1608 = vmatpush1.msra.mxu0 %v1585
    %1609 = vmatprep.subr.mxu0 0.0
    %1610 = vmatpush1.msra.mxu0 %v1586
    %1611 = vmatprep.subr.mxu0 0.0
    %1612 = vmatpush1.msra.mxu0 %v1587
    %1613 = vmatprep.subr.mxu0 0.0
    %1614 = vmatpush1.msra.mxu0 %v1588
    %1615 = vmatprep.subr.mxu0 0.0
    %1616 = vmatpush1.msra.mxu0 %v1589
    %1617 = vmatprep.subr.mxu0 0.0
    %1618 = vmatpush1.msra.mxu0 %v1590
    %1619 = vmatprep.subr.mxu0 0.0
    %1620 = vmatpush1.msra.mxu0 %v1591
    %1621 = vmatprep.subr.mxu0 0.0
    %1622 = vmatpush1.msra.mxu0 0.0
    %1623 = vmatprep.subr.mxu0 0.0
    %1624 = vmatpush1.msra.mxu0 0.0
    %1625 = vmatprep.subr.mxu0 0.0
    %1626 = vmatpush1.msra.mxu0 0.0
    %1627 = vmatprep.subr.mxu0 0.0
    %1628 = vmatpush1.msra.mxu0 0.0
    %1629 = vmatprep.subr.mxu0 0.0
    %1630 = vmatpush1.msra.mxu0 0.0
    %1631 = vmatprep.subr.mxu0 0.0
    %1632 = vmatpush1.msra.mxu0 0.0
    %1633 = vmatprep.subr.mxu0 0.0
    %1634 = vmatpush1.msra.mxu0 0.0
    %1635 = vmatprep.subr.mxu0 0.0
    %1636 = vmatpush1.msra.mxu0 0.0
    %1637 = vmatprep.subr.mxu0 0.0
    %1638 = vmatpush1.msra.mxu0 0.0
    %1639 = vmatprep.subr.mxu0 0.0
    %1640 = vmatpush1.msra.mxu0 0.0
    %1641 = vmatprep.subr.mxu0 0.0
    %1642 = vmatpush1.msra.mxu0 0.0
    %1643 = vmatprep.subr.mxu0 0.0
    %1644 = vmatpush1.msra.mxu0 0.0
    %1645 = vmatprep.subr.mxu0 0.0
    %1646 = vmatpush1.msra.mxu0 0.0
    %1647 = vmatprep.subr.mxu0 0.0
    %1648 = vmatpush1.msra.mxu0 0.0
    %1649 = vmatprep.subr.mxu0 0.0
    %1650 = vmatpush1.msra.mxu0 0.0
    %1651 = vmatprep.subr.mxu0 0.0
    %1652 = vmatpush1.msra.mxu0 0.0
    %1653 = vmatprep.subr.mxu0 0.0
    %1654 = vmatpush1.msra.mxu0 0.0
    %1655 = vmatprep.subr.mxu0 0.0
    %1656 = vmatpush1.msra.mxu0 0.0
    %1657 = vmatprep.subr.mxu0 0.0
    %1658 = vmatpush1.msra.mxu0 0.0
    %1659 = vmatprep.subr.mxu0 0.0
    %1660 = vmatpush1.msra.mxu0 0.0
    %1661 = vmatprep.subr.mxu0 0.0
    %1662 = vmatpush1.msra.mxu0 0.0
    %1663 = vmatprep.subr.mxu0 0.0
    %1664 = vmatpush1.msra.mxu0 0.0
    %1665 = vmatprep.subr.mxu0 0.0
    %1666 = vmatpush1.msra.mxu0 0.0
    %1667 = vmatprep.subr.mxu0 0.0
    %1668 = vmatpush1.msra.mxu0 0.0
    %1669 = vmatprep.mubr.f32.mxu0 0.0
    %1670 = vmatmul.mubr.f32.gmra.mrb[0].mxu0 %v1594
    %v1671 = vpop.f32.mrb[0].mxu0
    %v1672 = vadd.f32 0.0, %v1671
    %v1673 = vpop.f32.mrb[0].mxu0
    %1674 = vmatprep.mubr.f32.mxu0 0.0
    %1675 = vmatmul.mubr.f32.gmra.mrb[0].mxu0 %v1597
    %v1676 = vpop.f32.mrb[0].mxu0
    %v1677 = vadd.f32 0.0, %v1676
    %v1678 = vpop.f32.mrb[0].mxu0
    %1679 = vmatprep.mubr.f32.mxu0 0.0
    %1680 = vmatmul.mubr.f32.gmra.mrb[0].mxu0 %v1600
    %v1681 = vpop.f32.mrb[0].mxu0
    %v1682 = vadd.f32 0.0, %v1681
    %v1683 = vpop.f32.mrb[0].mxu0
    %1684 = vmatprep.mubr.f32.mxu0 0.0
    %1685 = vmatmul.mubr.f32.gmra.mrb[0].mxu0 %v1603
    %v1686 = vpop.f32.mrb[0].mxu0
    %v1687 = vadd.f32 0.0, %v1686
    %v1688 = vpop.f32.mrb[0].mxu0
    %1689 = vdwg.mxu0
    %v1690 = vadd.f32 %v1394, %v1672
    %v1691 = vadd.f32 %v1395, %v1677
    %v1692 = vadd.f32 %v1396, %v1682
    %v1693 = vadd.f32 %v1397, %v1687
    %v1694 = vld [vmem:[%s15] sm:$0x1]
    %v1696 = vlaneseq
    %v1697 = vshrl.u32 %v1696, 7
    %v1698 = vsub.s32 0, %v1697
    %v1699 = vrot.slane %v1694, %v1698
    %v1701 = vadd.f32 %v1690, %v1699
    %v1702 = vadd.f32 %v1691, %v1699
    %v1703 = vadd.f32 %v1692, %v1699
    %v1704 = vadd.f32 %v1693, %v1699
    %v1709 = vrot.slane %v1702, 7
    %vm1710 = vcmask 1041409
    %v1711 = vsel %vm1710, %v1709, %v1701
    %v1712 = vrot.slane %v1703, 6
    %vm1713 = vcmask 1042434
    %v1714 = vsel %vm1713, %v1712, %v1711
    %v1715 = vrot.slane %v1704, 5
    %vm1716 = vcmask 1043459
    %v1717 = vsel %vm1716, %v1715, %v1714
    %v1719 = vrot.slane %v1701, 1
    %v1720 = vsel %vm1710, %v1702, %v1719
    %v1721 = vrot.slane %v1703, 7
    %v1722 = vsel %vm1713, %v1721, %v1720
    %v1723 = vrot.slane %v1704, 6
    %v1724 = vsel %vm1716, %v1723, %v1722
    %1725 = vrot.lane.b32.xlu0 %v1724, 32
    %v1726 = vpop.permute.xlu0 %1725
    %v1728 = vrot.slane %v1701, 2
    %v1729 = vrot.slane %v1702, 1
    %v1730 = vsel %vm1710, %v1729, %v1728
    %v1731 = vsel %vm1713, %v1703, %v1730
    %v1732 = vrot.slane %v1704, 7
    %v1733 = vsel %vm1716, %v1732, %v1731
    %1734 = vrot.lane.b32.xlu0 %v1733, 64
    %v1735 = vpop.permute.xlu0 %1734
    %v1737 = vrot.slane %v1701, 3
    %v1738 = vrot.slane %v1702, 2
    %v1739 = vsel %vm1710, %v1738, %v1737
    %v1740 = vrot.slane %v1703, 1
    %v1741 = vsel %vm1713, %v1740, %v1739
    %v1742 = vsel %vm1716, %v1704, %v1741
    %1743 = vrot.lane.b32.xlu0 %v1742, 96
    %v1744 = vpop.permute.xlu0 %1743
    %v1746 = vrot.slane %v1701, 4
    %v1747 = vrot.slane %v1702, 3
    %v1748 = vsel %vm1710, %v1747, %v1746
    %v1749 = vrot.slane %v1703, 2
    %v1750 = vsel %vm1713, %v1749, %v1748
    %v1751 = vrot.slane %v1704, 1
    %v1752 = vsel %vm1716, %v1751, %v1750
    %v1754 = vrot.slane %v1701, 5
    %v1755 = vrot.slane %v1702, 4
    %v1756 = vsel %vm1710, %v1755, %v1754
    %v1757 = vrot.slane %v1703, 3
    %v1758 = vsel %vm1713, %v1757, %v1756
    %v1759 = vrot.slane %v1704, 2
    %v1760 = vsel %vm1716, %v1759, %v1758
    %1761 = vrot.lane.b32.xlu0 %v1760, 32
    %v1762 = vpop.permute.xlu0 %1761
    %v1764 = vrot.slane %v1701, 6
    %v1765 = vrot.slane %v1702, 5
    %v1766 = vsel %vm1710, %v1765, %v1764
    %v1767 = vrot.slane %v1703, 4
    %v1768 = vsel %vm1713, %v1767, %v1766
    %v1769 = vrot.slane %v1704, 3
    %v1770 = vsel %vm1716, %v1769, %v1768
    %1771 = vrot.lane.b32.xlu0 %v1770, 64
    %v1772 = vpop.permute.xlu0 %1771
    %v1774 = vrot.slane %v1701, 7
    %v1775 = vrot.slane %v1702, 6
    %v1776 = vsel %vm1710, %v1775, %v1774
    %v1777 = vrot.slane %v1703, 5
    %v1778 = vsel %vm1713, %v1777, %v1776
    %v1779 = vrot.slane %v1704, 4
    %v1780 = vsel %vm1716, %v1779, %v1778
    %1781 = vrot.lane.b32.xlu0 %v1780, 96
    %v1782 = vpop.permute.xlu0 %1781
    %v1784 = vsel %vm135, %v1717, %v1726
    %v1785 = vsel %vm1592, %v1784, %v1735
    %vm1786 = vcmask 785408
    %v1787 = vsel %vm1786, %v1785, %v1744
    %v1788 = vsel %vm135, %v1752, %v1762
    %v1789 = vsel %vm1592, %v1788, %v1772
    %v1790 = vsel %vm1786, %v1789, %v1782
    %v1793 = vcombine.low %v1787, %v1790
    %1795 = vst [vmem:[#allocation10] sm:$0xff] %v1793
    // Predicated region
    $region82: #{tpu_custom_call.1} parent=1 // pred_check
      _
    $region83: #{tpu_custom_call.1} parent=1 // pred_check_branch
      %1797 = sbr.rel (0) target = $region85
    $region84: #{tpu_custom_call.1} parent=1 // pred_region
      %s1799 = ssub.s32 128, 128
      %1800 = vsyncadd [#allocation4], %s1799
      %s1802 = sshll.u32 [#allocation10], 4
      %s1803 = int_to_ptr.vmem [resolvable:$true] %s1802
      %1805 = dma.vmem_to_hbm [thread:$0]  %s1803, 128, %s16, [#allocation4]
    $region85: #{tpu_custom_call.1} parent=1 // pred_fallthru
      _
    // Predicated region
    $region86: #{tpu_custom_call.1} parent=1 // pred_check
      _
    $region87: #{tpu_custom_call.1} parent=1 // pred_check_branch
      %1807 = sbr.rel (0) target = $region89
    $region88: #{tpu_custom_call.1} parent=1 // pred_region
      %1808 = dma.done [#allocation4], 128
    $region89: #{tpu_custom_call.1} parent=1 // pred_fallthru
      _
    %1809 = vsyncpa [#allocation3], 1
    %1810 = vsyncpa [#allocation6], 1
    %1811 = vsyncpa [#allocation9], 1
    %1812 = vsyncpa [#allocation4], 1

</llo_original>
